<compile_context>
chip_gen: v6e
topology: v6e:2x2x1
jax: 0.10.0
libtpu: 0.0.40
codegen_flags: <defaults>
</compile_context>

<pallas_src>
import jax
import jax.numpy as jnp
from jax import lax
from jax.experimental import pallas as pl
from jax.experimental.pallas import tpu as pltpu

DIM_IN = 30                 # 14 attribute + 16 measurement features
DIM_Z = 32                  # attention hidden size
DIM_FEAT = DIM_IN + 2       # 32 = landmark feature width (X ++ Y)
DIM_CAT = 3 * DIM_IN + 4    # 94 = width of [tg_X | tg_f1 | tg_f2]
OUT_LANES = 128             # lane-dense fused output slab width
INV_TEMP = 1.0 / (float(DIM_Z) ** 0.5)

# weight-slab row offsets: every block is 32 sublanes tall, 64 lanes wide
_WROW_K = 0        # [att_k.w | pred_k.w]      rows 0:30 real, 30:32 zero
_WROW_Q1W1 = 32    # lanes 0:32 att_q.w (pad) | lanes 32:64 w_1.w
_WROW_W2QA = 64    # lanes 0:32 w_2.w         | lanes 32:64 pred_q.w[ 0:30] (pad)
_WROW_QBQC = 96    # lanes 0:32 pred_q.w[30:62] | lanes 32:64 pred_q.w[62:94]
_WSLAB_ROWS = 128

_NT = (((1,), (1,)), ((), ()))   # contract lhs-last with rhs-last  (q @ k^T)


def _round_up8(n):
    return ((n + 7) // 8) * 8


def _ripgeo_kernel(lm_feat_ref, tg_feat0_ref, delays_ref, w_ref, b_ref, scal_ref,
                   out_ref):
    gamma_1 = scal_ref[0]
    gamma_2 = scal_ref[1]
    gamma_3 = scal_ref[2]
    alpha = scal_ref[3]
    beta = scal_ref[4]

    lm_feat = lm_feat_ref[...]        # (N1, 32) = [lm_X | lm_Y]
    tg_feat0 = tg_feat0_ref[...]      # (N2, 32) = [tg_X | 0 0]
    n1 = lm_feat.shape[0]
    n2 = tg_feat0.shape[0]
    rl = _round_up8(n1)               # static: row offset of tg_delay in the slab

    def matmul(x, w):
        return jnp.dot(x, w, preferred_element_type=jnp.float32)

    def row_softmax(s):
        # exact normalization (approx reciprocal kept off the softmax path — review)
        m = jnp.max(s, axis=-1, keepdims=True)
        e = jnp.exp(s - m)
        return e / jnp.sum(e, axis=-1, keepdims=True)

    # ---- fused key projections for both attentions (single MXU push) -----------
    # weight rows 30,31 are zero, so the lm_Y lanes of lm_feat contribute nothing.
    k_all = matmul(lm_feat, w_ref[_WROW_K:_WROW_K + 32, :]) + b_ref[0:1, :]   # (N1,64)
    k1 = k_all[:, :DIM_Z]             # SimpleAttention1 keys
    k2 = k_all[:, DIM_Z:]             # predictor keys

    # ---- SimpleAttention1: attribute-similarity scores --------------------------
    q1 = matmul(tg_feat0, w_ref[_WROW_Q1W1:_WROW_Q1W1 + 32, 0:32]) + b_ref[1:2, 0:32]
    s1 = lax.dot_general(q1 * INV_TEMP, k1, _NT, preferred_element_type=jnp.float32)
    attribute_score = jnp.exp(row_softmax(s1))                    # (N2, N1)
    # NOTE: SimpleAttention1's value projection only feeds the discarded first
    # return value of the reference forward(), so it is skipped.

    # ---- delay-based edge scores (VPU/EUP only) ----------------------------------
    lm_delay = delays_ref[0:n1, :]                                 # (N1, 1)
    tg_delay = delays_ref[rl:rl + n2, :]                           # (N2, 1)
    delay_score = jnp.exp(-gamma_1 * (alpha * lm_delay + beta))
    rou2tar_0 = jnp.exp(-gamma_2 * (alpha * tg_delay + beta))
    rou2tar_1 = jnp.exp(-gamma_3 * (alpha * tg_delay + beta))

    router_0 = jnp.mean(lm_feat, axis=0, keepdims=True)            # (1, 32)

    # ---- star-GNN step 1: w_1(D0^-1 A0 X0); router row folded into the matmul ---
    # target row i of dense D0:  sum_j attr[i,j] + 1 (self loop) + rou2tar_0[i]
    deg_tg0 = jnp.sum(attribute_score, axis=-1, keepdims=True) + 1.0 + rou2tar_0
    tg_agg0 = matmul(attribute_score, lm_feat) + tg_feat0 + rou2tar_0 * router_0
    tg_in0 = tg_agg0 * pl.reciprocal(deg_tg0, approx=True)
    # router row of dense D0:  sum_j delay_score[j] + 1 (self loop)
    deg_r0 = jnp.sum(delay_score, axis=0, keepdims=True) + 1.0      # (1, 1)
    r_agg0 = jnp.sum(delay_score * lm_feat, axis=0, keepdims=True) + router_0
    r_in0 = r_agg0 * pl.reciprocal(deg_r0, approx=True)

    w1_in = jnp.concatenate([tg_in0, r_in0], axis=0)                # (N2+1, 32)
    f1_all = (matmul(w1_in, w_ref[_WROW_Q1W1:_WROW_Q1W1 + 32, 32:64])
              + b_ref[1:2, 32:64])
    tg_f1 = f1_all[0:n2, :]                                         # (N2, 32)
    router_1 = f1_all[n2:n2 + 1, :]                                 # (1, 32)

    # ---- star-GNN step 2: w_2(D1^-1 A1 X1) — target rows -------------------------
    deg_tg1 = 1.0 + rou2tar_1
    tg_in1 = (tg_f1 + rou2tar_1 * router_1) * pl.reciprocal(deg_tg1, approx=True)
    tg_f2 = (matmul(tg_in1, w_ref[_WROW_W2QA:_WROW_W2QA + 32, 0:32])
             + b_ref[2:3, 0:32])                                    # (N2, 32)

    # ---- SimpleAttention2 predictor (collaborative MLP) --------------------------
    # query via three 32-aligned split dots: keeps the lane-unaligned concat off the
    # y_pred critical path (equivalent to feat_cat @ pred_q.w + b up to fp order).
    q2 = (matmul(tg_feat0, w_ref[_WROW_W2QA:_WROW_W2QA + 32, 32:64])
          + matmul(tg_f1, w_ref[_WROW_QBQC:_WROW_QBQC + 32, 0:32])
          + matmul(tg_f2, w_ref[_WROW_QBQC:_WROW_QBQC + 32, 32:64])
          + b_ref[2:3, 32:64])
    s2 = lax.dot_general(q2 * INV_TEMP, k2, _NT, preferred_element_type=jnp.float32)
    attn2 = row_softmax(s2)                                         # (N2, N1)

    # pred_v (2->2) projection of lm_Y on the VPU (no M=2 MXU push); lm_Y lives in
    # lanes 30:32 of lm_feat so it does not need its own input DMA.
    lm_y0 = lm_feat[:, DIM_IN:DIM_IN + 1]                           # (N1, 1)
    lm_y1 = lm_feat[:, DIM_IN + 1:DIM_IN + 2]                       # (N1, 1)
    v2 = lm_y0 * b_ref[3:4, 0:2] + lm_y1 * b_ref[4:5, 0:2] + b_ref[5:6, 0:2]  # (N1,2)
    y_pred = matmul(attn2, v2)                                      # (N2, 2)

    # ---- single lane-dense, unmasked full-width output store ---------------------
    tg_X = tg_feat0[:, 0:DIM_IN]
    pad = jnp.zeros((n2, OUT_LANES - (DIM_CAT + 2)), jnp.float32)
    out_ref[...] = jnp.concatenate([tg_X, tg_f1, tg_f2, y_pred, pad], axis=-1)


def init_params(key):
    ks = jax.random.split(key, 7)

    def lin(k, d_in, d_out, scale=0.1):
        kw, kb = jax.random.split(k)
        w = jax.random.normal(kw, (d_in, d_out), jnp.float32) * scale
        b = jax.random.normal(kb, (1, d_out), jnp.float32) * scale
        return w, b

    params = {
        "att_q": lin(ks[0], DIM_IN, DIM_Z),
        "att_k": lin(ks[1], DIM_IN, DIM_Z),
        # att_attribute.v_w only feeds the discarded first return value -> skipped.
        "w1": lin(ks[2], DIM_FEAT, DIM_FEAT),
        "w2": lin(ks[3], DIM_FEAT, DIM_FEAT),
        "pred_q": lin(ks[4], DIM_CAT, DIM_Z),
        "pred_k": lin(ks[5], DIM_IN, DIM_Z),
        "pred_v": lin(ks[6], 2, 2),
        # nn.Parameter init values: gamma_1/2/3 = 1, alpha = 1, beta = 0
        "scalars": jnp.array([1.0, 1.0, 1.0, 1.0, 0.0], jnp.float32),
    }
    return params
    # TODO(synk): the collaborative_mlp=False branch (Linear/ReLU/Linear) is dead
    # code for the default configuration and is not implemented.


def pack_params(params):
    """Param-only prep, hoisted out of the jitted forward (run once).

    Packs all 13 tiny weights/biases into one (128, 64) weight slab and one (8, 64)
    bias slab so the kernel sees 2 parameter DMAs instead of 13.
    """
    aq_w, aq_b = params["att_q"]
    ak_w, ak_b = params["att_k"]
    w1_w, w1_b = params["w1"]
    w2_w, w2_b = params["w2"]
    pq_w, pq_b = params["pred_q"]
    pk_w, pk_b = params["pred_k"]
    pv_w, pv_b = params["pred_v"]

    def pad_rows(w, rows=32):
        return jnp.concatenate(
            [w, jnp.zeros((rows - w.shape[0], w.shape[1]), jnp.float32)], axis=0)

    wslab = jnp.concatenate([
        pad_rows(jnp.concatenate([ak_w, pk_w], axis=1)),                   # rows   0:32
        jnp.concatenate([pad_rows(aq_w), w1_w], axis=1),                   # rows  32:64
        jnp.concatenate([w2_w, pad_rows(pq_w[0:DIM_IN])], axis=1),         # rows  64:96
        jnp.concatenate([pq_w[DIM_IN:DIM_IN + 32],
                         pq_w[DIM_IN + 32:DIM_CAT]], axis=1),              # rows 96:128
    ], axis=0).astype(jnp.float32)
    assert wslab.shape == (_WSLAB_ROWS, 64)

    def small_row(v):
        return jnp.concatenate([v, jnp.zeros((1, 64 - v.shape[1]), jnp.float32)],
                               axis=1)

    bslab = jnp.concatenate([
        jnp.concatenate([ak_b, pk_b], axis=1),   # row 0: fused key bias (1, 64)
        jnp.concatenate([aq_b, w1_b], axis=1),   # row 1: att_q.b | w_1.b
        jnp.concatenate([w2_b, pq_b], axis=1),   # row 2: w_2.b   | pred_q.b
        small_row(pv_w[0:1, :]),                 # row 3: pred_v.w row 0
        small_row(pv_w[1:2, :]),                 # row 4: pred_v.w row 1
        small_row(pv_b),                         # row 5: pred_v.b
        jnp.zeros((2, 64), jnp.float32),         # rows 6-7: pad to (8, 64)
    ], axis=0).astype(jnp.float32)

    return {"w": wslab, "b": bslab, "scalars": params["scalars"]}


@jax.jit
def ripgeo_forward(packed, lm_X, lm_Y, tg_X, tg_Y, lm_delay, tg_delay):
    del tg_Y  # only used in the PyTorch code to read N2
    N1 = lm_X.shape[0]
    N2 = tg_X.shape[0]
    rl = _round_up8(N1)
    rt = _round_up8(N2)

    # data-side glue only (tiny, runs in XLA); param prep lives in pack_params()
    lm_feature = jnp.concatenate([lm_X, lm_Y], axis=1).astype(jnp.float32)     # (N1,32)
    tg_feature_0 = jnp.concatenate(
        [tg_X.astype(jnp.float32), jnp.zeros((N2, 2), jnp.float32)], axis=1)   # (N2,32)
    delays = jnp.concatenate([
        jnp.pad(lm_delay.reshape(N1, 1).astype(jnp.float32), ((0, rl - N1), (0, 0))),
        jnp.pad(tg_delay.reshape(N2, 1).astype(jnp.float32), ((0, rt - N2), (0, 0))),
    ], axis=0)                                                                 # (rl+rt,1)

    inputs = (lm_feature, tg_feature_0, delays,
              packed["w"], packed["b"], packed["scalars"])
    in_specs = [pl.BlockSpec(memory_space=pltpu.MemorySpace.VMEM) for _ in range(5)]
    in_specs.append(pl.BlockSpec(memory_space=pltpu.MemorySpace.SMEM))

    flops = 2 * (
        N1 * DIM_FEAT * 2 * DIM_Z            # fused key projections
        + N2 * DIM_FEAT * DIM_Z              # q1
        + 2 * N2 * N1 * DIM_Z                # scores1 + scores2
        + N2 * N1 * DIM_FEAT                 # attn @ lm_feature
        + (N2 + 1) * DIM_FEAT * DIM_FEAT     # w_1 (targets + folded router row)
        + N2 * DIM_FEAT * DIM_FEAT           # w_2
        + 3 * N2 * DIM_FEAT * DIM_Z          # predictor q (split dots)
        + N1 * 2 * 2 + N2 * N1 * 2           # v projection + y_pred
    )
    bytes_accessed = 4 * (sum(int(x.size) for x in inputs) + N2 * OUT_LANES)
    cost = pl.CostEstimate(
        flops=int(flops),
        transcendentals=int(3 * N2 * N1 + N1 + 2 * N2),
        bytes_accessed=int(bytes_accessed),
    )

    # TODO(synk): for production-sized N2 (and v7x's 2 TensorCores) add a 1-D
    # "parallel" grid over target-row blocks / batched graphs; a grid is a no-op
    # at N2=8 so it is intentionally omitted here.
    slab = pl.pallas_call(
        _ripgeo_kernel,
        out_shape=jax.ShapeDtypeStruct((N2, OUT_LANES), jnp.float32),
        in_specs=in_specs,
        out_specs=pl.BlockSpec(memory_space=pltpu.MemorySpace.VMEM),
        cost_estimate=cost,
    )(*inputs)

    final_tg_feature = slab[:, :DIM_CAT]            # (N2, 94) = [tg_X|tg_f1|tg_f2]
    y_pred = slab[:, DIM_CAT:DIM_CAT + 2]           # (N2, 2)
    return y_pred, final_tg_feature


if __name__ == "__main__":
    key = jax.random.PRNGKey(0)
    kp, k1, k2, k3, k4, k5, k6 = jax.random.split(key, 7)
    N1, N2 = 16, 8  # landmarks, targets

    params = init_params(kp)
    packed = pack_params(params)          # one-time param prep (outside jit)

    lm_X = jax.random.normal(k1, (N1, DIM_IN), jnp.float32)
    lm_Y = jax.random.normal(k2, (N1, 2), jnp.float32)
    tg_X = jax.random.normal(k3, (N2, DIM_IN), jnp.float32)
    tg_Y = jax.random.normal(k4, (N2, 2), jnp.float32)
    lm_delay = jax.random.uniform(k5, (N1, 1), jnp.float32)
    tg_delay = jax.random.uniform(k6, (N2, 1), jnp.float32)

    y_pred, final_tg_feature = ripgeo_forward(
        packed, lm_X, lm_Y, tg_X, tg_Y, lm_delay, tg_delay)
    jax.block_until_ready((y_pred, final_tg_feature))

    assert y_pred.shape == (N2, 2)
    assert final_tg_feature.shape == (N2, DIM_CAT)  # (8, 94)
    assert bool(jnp.all(jnp.isfinite(y_pred)))
    assert bool(jnp.all(jnp.isfinite(final_tg_feature)))
    print("KERNEL_OK")
</pallas_src>

<mosaic_0001>
module attributes {stable_mosaic.version = 11 : i64} {
  func.func @_ripgeo_kernel(%arg0: memref<16x32xf32, #tpu.memory_space<vmem>>, %arg1: memref<8x32xf32, #tpu.memory_space<vmem>>, %arg2: memref<24x1xf32, #tpu.memory_space<vmem>>, %arg3: memref<128x64xf32, #tpu.memory_space<vmem>>, %arg4: memref<8x64xf32, #tpu.memory_space<vmem>>, %arg5: memref<5xf32, #tpu.memory_space<smem>>, %arg6: memref<8x128xf32, #tpu.memory_space<vmem>>) attributes {dimension_semantics = [], scalar_prefetch = 0 : i64, scratch_operands = 0 : i64, tpu.core_type = #tpu.core_type<tc>} {
    %c0 = arith.constant 0 : index
    %0 = memref.load %arg5[%c0] : memref<5xf32, #tpu.memory_space<smem>>
    %c1 = arith.constant 1 : index
    %1 = memref.load %arg5[%c1] : memref<5xf32, #tpu.memory_space<smem>>
    %c2 = arith.constant 2 : index
    %2 = memref.load %arg5[%c2] : memref<5xf32, #tpu.memory_space<smem>>
    %c3 = arith.constant 3 : index
    %3 = memref.load %arg5[%c3] : memref<5xf32, #tpu.memory_space<smem>>
    %c4 = arith.constant 4 : index
    %4 = memref.load %arg5[%c4] : memref<5xf32, #tpu.memory_space<smem>>
    %c0_0 = arith.constant 0 : index
    %c0_1 = arith.constant 0 : index
    %5 = vector.load %arg0[%c0_0, %c0_1] : memref<16x32xf32, #tpu.memory_space<vmem>>, vector<16x32xf32>
    %c0_2 = arith.constant 0 : index
    %c0_3 = arith.constant 0 : index
    %6 = vector.load %arg1[%c0_2, %c0_3] : memref<8x32xf32, #tpu.memory_space<vmem>>, vector<8x32xf32>
    %c0_4 = arith.constant 0 : index
    %c0_5 = arith.constant 0 : index
    %7 = vector.load %arg3[%c0_4, %c0_5] : memref<128x64xf32, #tpu.memory_space<vmem>>, vector<32x64xf32>
    %cst = arith.constant dense<0.000000e+00> : vector<16x64xf32>
    %8 = tpu.matmul %5, %7, %cst {dimension_numbers = #tpu.dot_dimension_numbers<[1], [0], [0], [1], [0, 0, 1, 1], [], []>} : vector<16x32xf32>, vector<32x64xf32>, vector<16x64xf32> -> vector<16x64xf32>
    %c0_6 = arith.constant 0 : index
    %c0_7 = arith.constant 0 : index
    %9 = vector.load %arg4[%c0_6, %c0_7] : memref<8x64xf32, #tpu.memory_space<vmem>>, vector<1x64xf32>
    %10 = vector.broadcast %9 : vector<1x64xf32> to vector<16x64xf32>
    %11 = arith.addf %8, %10 : vector<16x64xf32>
    %12 = vector.extract_strided_slice %11 {offsets = [0, 0], sizes = [16, 32], strides = [1, 1]} : vector<16x64xf32> to vector<16x32xf32>
    %13 = vector.extract_strided_slice %11 {offsets = [0, 32], sizes = [16, 32], strides = [1, 1]} : vector<16x64xf32> to vector<16x32xf32>
    %c32 = arith.constant 32 : index
    %c0_8 = arith.constant 0 : index
    %14 = vector.load %arg3[%c32, %c0_8] : memref<128x64xf32, #tpu.memory_space<vmem>>, vector<32x32xf32>
    %cst_9 = arith.constant dense<0.000000e+00> : vector<8x32xf32>
    %15 = tpu.matmul %6, %14, %cst_9 {dimension_numbers = #tpu.dot_dimension_numbers<[1], [0], [0], [1], [0, 0, 1, 1], [], []>} : vector<8x32xf32>, vector<32x32xf32>, vector<8x32xf32> -> vector<8x32xf32>
    %c1_10 = arith.constant 1 : index
    %c0_11 = arith.constant 0 : index
    %16 = vector.load %arg4[%c1_10, %c0_11] : memref<8x64xf32, #tpu.memory_space<vmem>>, vector<1x32xf32>
    %17 = vector.broadcast %16 : vector<1x32xf32> to vector<8x32xf32>
    %18 = arith.addf %15, %17 : vector<8x32xf32>
    %cst_12 = arith.constant 0.176776692 : f32
    %19 = vector.broadcast %cst_12 : f32 to vector<8x32xf32>
    %20 = arith.mulf %18, %19 : vector<8x32xf32>
    %cst_13 = arith.constant dense<0.000000e+00> : vector<8x16xf32>
    %21 = tpu.matmul %20, %12, %cst_13 {dimension_numbers = #tpu.dot_dimension_numbers<[1], [1], [0], [0], [0, 0, 1, 0], [], []>} : vector<8x32xf32>, vector<16x32xf32>, vector<8x16xf32> -> vector<8x16xf32>
    %cst_14 = arith.constant dense<0xFF800000> : vector<8xf32>
    %22 = vector.multi_reduction <maximumf>, %21, %cst_14 [1] : vector<8x16xf32> to vector<8xf32>
    %23 = vector.shape_cast %22 : vector<8xf32> to vector<8x1xf32>
    %24 = vector.broadcast %23 : vector<8x1xf32> to vector<8x16xf32>
    %25 = arith.subf %21, %24 : vector<8x16xf32>
    %26 = math.exp %25 : vector<8x16xf32>
    %cst_15 = arith.constant dense<0.000000e+00> : vector<8xf32>
    %27 = vector.multi_reduction <add>, %26, %cst_15 [1] : vector<8x16xf32> to vector<8xf32>
    %28 = vector.shape_cast %27 : vector<8xf32> to vector<8x1xf32>
    %29 = vector.broadcast %28 : vector<8x1xf32> to vector<8x16xf32>
    %30 = arith.divf %26, %29 : vector<8x16xf32>
    %31 = math.exp %30 : vector<8x16xf32>
    %c0_16 = arith.constant 0 : index
    %c0_17 = arith.constant 0 : index
    %32 = vector.load %arg2[%c0_16, %c0_17] : memref<24x1xf32, #tpu.memory_space<vmem>>, vector<16x1xf32>
    %c16 = arith.constant 16 : index
    %c0_18 = arith.constant 0 : index
    %33 = vector.load %arg2[%c16, %c0_18] : memref<24x1xf32, #tpu.memory_space<vmem>>, vector<8x1xf32>
    %cst_19 = arith.constant 0.000000e+00 : f32
    %34 = arith.subf %cst_19, %0 : f32
    %35 = vector.broadcast %3 : f32 to vector<16x1xf32>
    %36 = arith.mulf %35, %32 : vector<16x1xf32>
    %37 = vector.broadcast %4 : f32 to vector<16x1xf32>
    %38 = arith.addf %36, %37 : vector<16x1xf32>
    %39 = vector.broadcast %34 : f32 to vector<16x1xf32>
    %40 = arith.mulf %39, %38 : vector<16x1xf32>
    %41 = math.exp %40 : vector<16x1xf32>
    %cst_20 = arith.constant 0.000000e+00 : f32
    %42 = arith.subf %cst_20, %1 : f32
    %43 = vector.broadcast %3 : f32 to vector<8x1xf32>
    %44 = arith.mulf %43, %33 : vector<8x1xf32>
    %45 = vector.broadcast %4 : f32 to vector<8x1xf32>
    %46 = arith.addf %44, %45 : vector<8x1xf32>
    %47 = vector.broadcast %42 : f32 to vector<8x1xf32>
    %48 = arith.mulf %47, %46 : vector<8x1xf32>
    %49 = math.exp %48 : vector<8x1xf32>
    %cst_21 = arith.constant 0.000000e+00 : f32
    %50 = arith.subf %cst_21, %2 : f32
    %51 = vector.broadcast %3 : f32 to vector<8x1xf32>
    %52 = arith.mulf %51, %33 : vector<8x1xf32>
    %53 = vector.broadcast %4 : f32 to vector<8x1xf32>
    %54 = arith.addf %52, %53 : vector<8x1xf32>
    %55 = vector.broadcast %50 : f32 to vector<8x1xf32>
    %56 = arith.mulf %55, %54 : vector<8x1xf32>
    %57 = math.exp %56 : vector<8x1xf32>
    %cst_22 = arith.constant dense<0.000000e+00> : vector<32xf32>
    %58 = vector.multi_reduction <add>, %5, %cst_22 [0] : vector<16x32xf32> to vector<32xf32>
    %59 = vector.shape_cast %58 : vector<32xf32> to vector<1x32xf32>
    %cst_23 = arith.constant 1.600000e+01 : f32
    %60 = vector.broadcast %cst_23 : f32 to vector<1x32xf32>
    %61 = arith.divf %59, %60 : vector<1x32xf32>
    %cst_24 = arith.constant dense<0.000000e+00> : vector<8xf32>
    %62 = vector.multi_reduction <add>, %31, %cst_24 [1] : vector<8x16xf32> to vector<8xf32>
    %63 = vector.shape_cast %62 : vector<8xf32> to vector<8x1xf32>
    %cst_25 = arith.constant 1.000000e+00 : f32
    %64 = vector.broadcast %cst_25 : f32 to vector<8x1xf32>
    %65 = arith.addf %63, %64 : vector<8x1xf32>
    %66 = arith.addf %65, %49 : vector<8x1xf32>
    %cst_26 = arith.constant dense<0.000000e+00> : vector<8x32xf32>
    %67 = tpu.matmul %31, %5, %cst_26 {dimension_numbers = #tpu.dot_dimension_numbers<[1], [0], [0], [1], [0, 0, 1, 1], [], []>} : vector<8x16xf32>, vector<16x32xf32>, vector<8x32xf32> -> vector<8x32xf32>
    %68 = arith.addf %67, %6 : vector<8x32xf32>
    %69 = vector.broadcast %49 : vector<8x1xf32> to vector<8x32xf32>
    %70 = vector.broadcast %61 : vector<1x32xf32> to vector<8x32xf32>
    %71 = arith.mulf %69, %70 : vector<8x32xf32>
    %72 = arith.addf %68, %71 : vector<8x32xf32>
    %73 = tpu.reciprocal %66 {approx = true} : vector<8x1xf32> -> vector<8x1xf32>
    %74 = vector.broadcast %73 : vector<8x1xf32> to vector<8x32xf32>
    %75 = arith.mulf %72, %74 : vector<8x32xf32>
    %cst_27 = arith.constant dense<0.000000e+00> : vector<1xf32>
    %76 = vector.multi_reduction <add>, %41, %cst_27 [0] : vector<16x1xf32> to vector<1xf32>
    %77 = vector.shape_cast %76 : vector<1xf32> to vector<1x1xf32>
    %cst_28 = arith.constant 1.000000e+00 : f32
    %78 = vector.broadcast %cst_28 : f32 to vector<1x1xf32>
    %79 = arith.addf %77, %78 : vector<1x1xf32>
    %80 = vector.broadcast %41 : vector<16x1xf32> to vector<16x32xf32>
    %81 = arith.mulf %80, %5 : vector<16x32xf32>
    %cst_29 = arith.constant dense<0.000000e+00> : vector<32xf32>
    %82 = vector.multi_reduction <add>, %81, %cst_29 [0] : vector<16x32xf32> to vector<32xf32>
    %83 = vector.shape_cast %82 : vector<32xf32> to vector<1x32xf32>
    %84 = arith.addf %83, %61 : vector<1x32xf32>
    %85 = tpu.reciprocal %79 {approx = true} : vector<1x1xf32> -> vector<1x1xf32>
    %86 = vector.broadcast %85 : vector<1x1xf32> to vector<1x32xf32>
    %87 = arith.mulf %84, %86 : vector<1x32xf32>
    %88 = tpu.concatenate %75, %87 in 0 : vector<8x32xf32>, vector<1x32xf32> -> vector<9x32xf32>
    %c32_30 = arith.constant 32 : index
    %c32_31 = arith.constant 32 : index
    %89 = vector.load %arg3[%c32_30, %c32_31] : memref<128x64xf32, #tpu.memory_space<vmem>>, vector<32x32xf32>
    %cst_32 = arith.constant dense<0.000000e+00> : vector<9x32xf32>
    %90 = tpu.matmul %88, %89, %cst_32 {dimension_numbers = #tpu.dot_dimension_numbers<[1], [0], [0], [1], [0, 0, 1, 1], [], []>} : vector<9x32xf32>, vector<32x32xf32>, vector<9x32xf32> -> vector<9x32xf32>
    %c1_33 = arith.constant 1 : index
    %c32_34 = arith.constant 32 : index
    %91 = vector.load %arg4[%c1_33, %c32_34] : memref<8x64xf32, #tpu.memory_space<vmem>>, vector<1x32xf32>
    %92 = vector.broadcast %91 : vector<1x32xf32> to vector<9x32xf32>
    %93 = arith.addf %90, %92 : vector<9x32xf32>
    %94 = vector.extract_strided_slice %93 {offsets = [0, 0], sizes = [8, 32], strides = [1, 1]} : vector<9x32xf32> to vector<8x32xf32>
    %95 = vector.extract_strided_slice %93 {offsets = [8, 0], sizes = [1, 32], strides = [1, 1]} : vector<9x32xf32> to vector<1x32xf32>
    %cst_35 = arith.constant 1.000000e+00 : f32
    %96 = vector.broadcast %cst_35 : f32 to vector<8x1xf32>
    %97 = arith.addf %96, %57 : vector<8x1xf32>
    %98 = vector.broadcast %57 : vector<8x1xf32> to vector<8x32xf32>
    %99 = vector.broadcast %95 : vector<1x32xf32> to vector<8x32xf32>
    %100 = arith.mulf %98, %99 : vector<8x32xf32>
    %101 = arith.addf %94, %100 : vector<8x32xf32>
    %102 = tpu.reciprocal %97 {approx = true} : vector<8x1xf32> -> vector<8x1xf32>
    %103 = vector.broadcast %102 : vector<8x1xf32> to vector<8x32xf32>
    %104 = arith.mulf %101, %103 : vector<8x32xf32>
    %c64 = arith.constant 64 : index
    %c0_36 = arith.constant 0 : index
    %105 = vector.load %arg3[%c64, %c0_36] : memref<128x64xf32, #tpu.memory_space<vmem>>, vector<32x32xf32>
    %cst_37 = arith.constant dense<0.000000e+00> : vector<8x32xf32>
    %106 = tpu.matmul %104, %105, %cst_37 {dimension_numbers = #tpu.dot_dimension_numbers<[1], [0], [0], [1], [0, 0, 1, 1], [], []>} : vector<8x32xf32>, vector<32x32xf32>, vector<8x32xf32> -> vector<8x32xf32>
    %c2_38 = arith.constant 2 : index
    %c0_39 = arith.constant 0 : index
    %107 = vector.load %arg4[%c2_38, %c0_39] : memref<8x64xf32, #tpu.memory_space<vmem>>, vector<1x32xf32>
    %108 = vector.broadcast %107 : vector<1x32xf32> to vector<8x32xf32>
    %109 = arith.addf %106, %108 : vector<8x32xf32>
    %c64_40 = arith.constant 64 : index
    %c32_41 = arith.constant 32 : index
    %110 = vector.load %arg3[%c64_40, %c32_41] : memref<128x64xf32, #tpu.memory_space<vmem>>, vector<32x32xf32>
    %cst_42 = arith.constant dense<0.000000e+00> : vector<8x32xf32>
    %111 = tpu.matmul %6, %110, %cst_42 {dimension_numbers = #tpu.dot_dimension_numbers<[1], [0], [0], [1], [0, 0, 1, 1], [], []>} : vector<8x32xf32>, vector<32x32xf32>, vector<8x32xf32> -> vector<8x32xf32>
    %c96 = arith.constant 96 : index
    %c0_43 = arith.constant 0 : index
    %112 = vector.load %arg3[%c96, %c0_43] : memref<128x64xf32, #tpu.memory_space<vmem>>, vector<32x32xf32>
    %cst_44 = arith.constant dense<0.000000e+00> : vector<8x32xf32>
    %113 = tpu.matmul %94, %112, %cst_44 {dimension_numbers = #tpu.dot_dimension_numbers<[1], [0], [0], [1], [0, 0, 1, 1], [], []>} : vector<8x32xf32>, vector<32x32xf32>, vector<8x32xf32> -> vector<8x32xf32>
    %114 = arith.addf %111, %113 : vector<8x32xf32>
    %c96_45 = arith.constant 96 : index
    %c32_46 = arith.constant 32 : index
    %115 = vector.load %arg3[%c96_45, %c32_46] : memref<128x64xf32, #tpu.memory_space<vmem>>, vector<32x32xf32>
    %cst_47 = arith.constant dense<0.000000e+00> : vector<8x32xf32>
    %116 = tpu.matmul %109, %115, %cst_47 {dimension_numbers = #tpu.dot_dimension_numbers<[1], [0], [0], [1], [0, 0, 1, 1], [], []>} : vector<8x32xf32>, vector<32x32xf32>, vector<8x32xf32> -> vector<8x32xf32>
    %117 = arith.addf %114, %116 : vector<8x32xf32>
    %c2_48 = arith.constant 2 : index
    %c32_49 = arith.constant 32 : index
    %118 = vector.load %arg4[%c2_48, %c32_49] : memref<8x64xf32, #tpu.memory_space<vmem>>, vector<1x32xf32>
    %119 = vector.broadcast %118 : vector<1x32xf32> to vector<8x32xf32>
    %120 = arith.addf %117, %119 : vector<8x32xf32>
    %cst_50 = arith.constant 0.176776692 : f32
    %121 = vector.broadcast %cst_50 : f32 to vector<8x32xf32>
    %122 = arith.mulf %120, %121 : vector<8x32xf32>
    %cst_51 = arith.constant dense<0.000000e+00> : vector<8x16xf32>
    %123 = tpu.matmul %122, %13, %cst_51 {dimension_numbers = #tpu.dot_dimension_numbers<[1], [1], [0], [0], [0, 0, 1, 0], [], []>} : vector<8x32xf32>, vector<16x32xf32>, vector<8x16xf32> -> vector<8x16xf32>
    %cst_52 = arith.constant dense<0xFF800000> : vector<8xf32>
    %124 = vector.multi_reduction <maximumf>, %123, %cst_52 [1] : vector<8x16xf32> to vector<8xf32>
    %125 = vector.shape_cast %124 : vector<8xf32> to vector<8x1xf32>
    %126 = vector.broadcast %125 : vector<8x1xf32> to vector<8x16xf32>
    %127 = arith.subf %123, %126 : vector<8x16xf32>
    %128 = math.exp %127 : vector<8x16xf32>
    %cst_53 = arith.constant dense<0.000000e+00> : vector<8xf32>
    %129 = vector.multi_reduction <add>, %128, %cst_53 [1] : vector<8x16xf32> to vector<8xf32>
    %130 = vector.shape_cast %129 : vector<8xf32> to vector<8x1xf32>
    %131 = vector.broadcast %130 : vector<8x1xf32> to vector<8x16xf32>
    %132 = arith.divf %128, %131 : vector<8x16xf32>
    %133 = vector.extract_strided_slice %5 {offsets = [0, 30], sizes = [16, 1], strides = [1, 1]} : vector<16x32xf32> to vector<16x1xf32>
    %134 = vector.extract_strided_slice %5 {offsets = [0, 31], sizes = [16, 1], strides = [1, 1]} : vector<16x32xf32> to vector<16x1xf32>
    %c3_54 = arith.constant 3 : index
    %c0_55 = arith.constant 0 : index
    %135 = vector.load %arg4[%c3_54, %c0_55] : memref<8x64xf32, #tpu.memory_space<vmem>>, vector<1x2xf32>
    %136 = vector.broadcast %133 : vector<16x1xf32> to vector<16x2xf32>
    %137 = vector.broadcast %135 : vector<1x2xf32> to vector<16x2xf32>
    %138 = arith.mulf %136, %137 : vector<16x2xf32>
    %c4_56 = arith.constant 4 : index
    %c0_57 = arith.constant 0 : index
    %139 = vector.load %arg4[%c4_56, %c0_57] : memref<8x64xf32, #tpu.memory_space<vmem>>, vector<1x2xf32>
    %140 = vector.broadcast %134 : vector<16x1xf32> to vector<16x2xf32>
    %141 = vector.broadcast %139 : vector<1x2xf32> to vector<16x2xf32>
    %142 = arith.mulf %140, %141 : vector<16x2xf32>
    %143 = arith.addf %138, %142 : vector<16x2xf32>
    %c5 = arith.constant 5 : index
    %c0_58 = arith.constant 0 : index
    %144 = vector.load %arg4[%c5, %c0_58] : memref<8x64xf32, #tpu.memory_space<vmem>>, vector<1x2xf32>
    %145 = vector.broadcast %144 : vector<1x2xf32> to vector<16x2xf32>
    %146 = arith.addf %143, %145 : vector<16x2xf32>
    %cst_59 = arith.constant dense<0.000000e+00> : vector<8x2xf32>
    %147 = tpu.matmul %132, %146, %cst_59 {dimension_numbers = #tpu.dot_dimension_numbers<[1], [0], [0], [1], [0, 0, 1, 1], [], []>} : vector<8x16xf32>, vector<16x2xf32>, vector<8x2xf32> -> vector<8x2xf32>
    %148 = vector.extract_strided_slice %6 {offsets = [0, 0], sizes = [8, 30], strides = [1, 1]} : vector<8x32xf32> to vector<8x30xf32>
    %cst_60 = arith.constant 0.000000e+00 : f32
    %149 = vector.broadcast %cst_60 : f32 to vector<8x32xf32>
    %150 = tpu.concatenate %148, %94, %109, %147, %149 in 1 : vector<8x30xf32>, vector<8x32xf32>, vector<8x32xf32>, vector<8x2xf32>, vector<8x32xf32> -> vector<8x128xf32>
    %c0_61 = arith.constant 0 : index
    %c0_62 = arith.constant 0 : index
    %151 = vector.load %arg6[%c0_61, %c0_62] : memref<8x128xf32, #tpu.memory_space<vmem>>, vector<8x128xf32>
    tpu.vector_store %arg6[%c0_61, %c0_62], %150 {strides = array<i32>} : memref<8x128xf32, #tpu.memory_space<vmem>>, vector<8x128xf32>,
    return
  }
}

</mosaic_0001>

<llo_original>
// kernel: ripgeo_forward.1
$region0: #{ripgeo_forward.1}
  #allocation0 [shape = 'u32[]', space=smem, size = 0x4, offset = 0x4, fixed_abs, tag = 'smem constant byte address 0x4 - core index']
  #allocation1 [shape = 'u32[144,128]{1,0:T(1,128)}', space=vmem, size = 0x12000, scoped, tag = 'internal scratch']
  %s0 = inlined_call_operand.vmem [shape: f32[16,32], index: 0, kind: input, shape index: {}]
  %s1 = inlined_call_operand.vmem [shape: f32[8,32], index: 1, kind: input, shape index: {}]
  %s2 = inlined_call_operand.vmem [shape: f32[24,1], index: 2, kind: input, shape index: {}]
  %s3 = inlined_call_operand.vmem [shape: f32[128,64], index: 3, kind: input, shape index: {}]
  %s4 = inlined_call_operand.vmem [shape: f32[8,64], index: 4, kind: input, shape index: {}]
  %s5 = inlined_call_operand.vmem [shape: f32[5], index: 5, kind: input, shape index: {}]
  %s6 = inlined_call_operand.vmem [shape: f32[8,128], index: 6, kind: output, shape index: {}]
  %s7 = sld [smem:[#allocation0]]
  $region38: #{ripgeo_forward.1} parent=0
    _
  %s9 = ssub.s32 1, %s7
  %s10 = scalar_select 0, %s9, %s7
  $region1: #{ripgeo_forward.1} parent=0
    #allocation2 [shape = 'u8[512]{0}', space=smem, size = 0x200, scoped, tag = 'input window, operand 5, single buffered']
    #allocation3 [shape = 's32[1]{0}', space=sflag, size = 0x4, scoped, tag = 'scoped memory for ripgeo_forward.1']
    %11 = vsyncpa [#allocation3], 0
    // Predicated region
    $region2: #{ripgeo_forward.1} parent=1 // pred_check
      _
    $region3: #{ripgeo_forward.1} parent=1 // pred_check_branch
      %13 = sbr.rel (0) target = $region5
    $region4: #{ripgeo_forward.1} parent=1 // pred_region
      _
    $region5: #{ripgeo_forward.1} parent=1 // pred_fallthru
      _
    // Predicated region
    $region6: #{ripgeo_forward.1} parent=1 // pred_check
      _
    $region7: #{ripgeo_forward.1} parent=1 // pred_check_branch
      %15 = sbr.rel (0) target = $region9
    $region8: #{ripgeo_forward.1} parent=1 // pred_region
      _
    $region9: #{ripgeo_forward.1} parent=1 // pred_fallthru
      _
    // Predicated region
    $region10: #{ripgeo_forward.1} parent=1 // pred_check
      _
    $region11: #{ripgeo_forward.1} parent=1 // pred_check_branch
      %17 = sbr.rel (0) target = $region13
    $region12: #{ripgeo_forward.1} parent=1 // pred_region
      _
    $region13: #{ripgeo_forward.1} parent=1 // pred_fallthru
      _
    // Predicated region
    $region14: #{ripgeo_forward.1} parent=1 // pred_check
      _
    $region15: #{ripgeo_forward.1} parent=1 // pred_check_branch
      %19 = sbr.rel (0) target = $region17
    $region16: #{ripgeo_forward.1} parent=1 // pred_region
      _
    $region17: #{ripgeo_forward.1} parent=1 // pred_fallthru
      _
    // Predicated region
    $region18: #{ripgeo_forward.1} parent=1 // pred_check
      _
    $region19: #{ripgeo_forward.1} parent=1 // pred_check_branch
      %21 = sbr.rel (0) target = $region21
    $region20: #{ripgeo_forward.1} parent=1 // pred_region
      _
    $region21: #{ripgeo_forward.1} parent=1 // pred_fallthru
      _
    // Predicated region
    $region22: #{ripgeo_forward.1} parent=1 // pred_check
      _
    $region23: #{ripgeo_forward.1} parent=1 // pred_check_branch
      %23 = sbr.rel (0) target = $region25
    $region24: #{ripgeo_forward.1} parent=1 // pred_region
      %s25 = ssub.s32 16, 16
      %26 = vsyncadd [#allocation3], %s25
      %s28 = sshll.u32 %s5, 4
      %s29 = int_to_ptr.vmem [resolvable:$true] %s28
      %31 = dma.vmem_to_smem %s29, 16, [#allocation2], [#allocation3]
    $region25: #{ripgeo_forward.1} parent=1 // pred_fallthru
      _
    // Predicated region
    $region26: #{ripgeo_forward.1} parent=1 // pred_check
      _
    $region27: #{ripgeo_forward.1} parent=1 // pred_check_branch
      %33 = sbr.rel (0) target = $region29
    $region28: #{ripgeo_forward.1} parent=1 // pred_region
      %34 = dma.done [#allocation3], 16
    $region29: #{ripgeo_forward.1} parent=1 // pred_fallthru
      _
    %35 = sfence
    %s36 = sld [smem:[#allocation2]]
    %s37 = sld [smem:[#allocation2 + $0x1]]
    %s38 = sld [smem:[#allocation2 + $0x2]]
    %s39 = sld [smem:[#allocation2 + $0x3]]
    %s40 = sld [smem:[#allocation2 + $0x4]]
    %v41 = vld [vmem:[%s0] sm:$0xff]
    %v42 = vld [vmem:[%s0 + $0x8] sm:$0xff]
    %v43 = vld [vmem:[%s1] sm:$0xff]
    %v44 = vld [vmem:[%s3] sm:$0xff]
    %v45 = vld [vmem:[%s3 + $0x8] sm:$0xff]
    %v46 = vld [vmem:[%s3 + $0x10] sm:$0xff]
    %v47 = vld [vmem:[%s3 + $0x18] sm:$0xff]
    %v48 = vld [vmem:[%s4] sm:$0x1]
    %v49 = vlaneseq
    %v50 = vshrl.u32 %v49, 7
    %v51 = vsub.s32 0, %v50
    %v52 = vrot.slane %v48, %v51
    %vm53 = vcmask 261120
    %v55 = vsel %vm53, %v41, 0
    %v58 = vsel %vm53, %v42, 0
    %60 = vmatprep.subr.mxu0 0.0
    %61 = vmatpush1.msra.mxu0 0.0
    %62 = vmatprep.subr.mxu0 0.0
    %63 = vmatpush1.msra.mxu0 0.0
    %64 = vmatprep.subr.mxu0 0.0
    %65 = vmatpush1.msra.mxu0 0.0
    %66 = vmatprep.subr.mxu0 0.0
    %67 = vmatpush1.msra.mxu0 0.0
    %68 = vmatprep.subr.mxu0 0.0
    %69 = vmatpush1.msra.mxu0 0.0
    %70 = vmatprep.subr.mxu0 0.0
    %71 = vmatpush1.msra.mxu0 0.0
    %72 = vmatprep.subr.mxu0 0.0
    %73 = vmatpush1.msra.mxu0 0.0
    %74 = vmatprep.subr.mxu0 0.0
    %75 = vmatpush1.msra.mxu0 0.0
    %76 = vmatprep.subr.mxu0 0.0
    %77 = vmatpush1.msra.mxu0 0.0
    %78 = vmatprep.subr.mxu0 0.0
    %79 = vmatpush1.msra.mxu0 0.0
    %80 = vmatprep.subr.mxu0 0.0
    %81 = vmatpush1.msra.mxu0 0.0
    %82 = vmatprep.subr.mxu0 0.0
    %83 = vmatpush1.msra.mxu0 0.0
    %84 = vmatprep.subr.mxu0 0.0
    %85 = vmatpush1.msra.mxu0 %v47
    %86 = vmatprep.subr.mxu0 0.0
    %87 = vmatpush1.msra.mxu0 %v46
    %88 = vmatprep.subr.mxu0 0.0
    %89 = vmatpush1.msra.mxu0 %v45
    %90 = vmatprep.subr.mxu0 0.0
    %91 = vmatpush1.msra.mxu0 %v44
    %92 = vmatprep.subr.mxu0 0.0
    %93 = vmatpush2.msra.mxu0 0.0
    %94 = vmatprep.subr.mxu0 0.0
    %95 = vmatpush2.msra.mxu0 0.0
    %96 = vmatprep.subr.mxu0 0.0
    %97 = vmatpush2.msra.mxu0 0.0
    %98 = vmatprep.subr.mxu0 0.0
    %99 = vmatpush2.msra.mxu0 0.0
    %100 = vmatprep.subr.mxu0 0.0
    %101 = vmatpush2.msra.mxu0 0.0
    %102 = vmatprep.subr.mxu0 0.0
    %103 = vmatpush2.msra.mxu0 0.0
    %104 = vmatprep.subr.mxu0 0.0
    %105 = vmatpush2.msra.mxu0 0.0
    %106 = vmatprep.subr.mxu0 0.0
    %107 = vmatpush2.msra.mxu0 0.0
    %108 = vmatprep.subr.mxu0 0.0
    %109 = vmatpush2.msra.mxu0 0.0
    %110 = vmatprep.subr.mxu0 0.0
    %111 = vmatpush2.msra.mxu0 0.0
    %112 = vmatprep.subr.mxu0 0.0
    %113 = vmatpush2.msra.mxu0 0.0
    %114 = vmatprep.subr.mxu0 0.0
    %115 = vmatpush2.msra.mxu0 0.0
    %116 = vmatprep.subr.mxu0 0.0
    %117 = vmatpush2.msra.mxu0 0.0
    %118 = vmatprep.subr.mxu0 0.0
    %119 = vmatpush2.msra.mxu0 0.0
    %120 = vmatprep.subr.mxu0 0.0
    %121 = vmatpush2.msra.mxu0 0.0
    %122 = vmatprep.subr.mxu0 0.0
    %123 = vmatpush2.msra.mxu0 0.0
    %124 = vmatprep.mubr.f32.mxu0 0.0
    %125 = vmatmul.mubr.f32.gmra.mxu0 %v55
    %v126 = vpop.f32.mrf.mxu0
    %v127 = vadd.f32 %v52, %v126
    %v128 = vpop.f32.mrf.mxu0
    %129 = vmatprep.mubr.f32.mxu0 0.0
    %130 = vmatmul.mubr.f32.gmra.mxu0 %v58
    %v131 = vpop.f32.mrf.mxu0
    %v132 = vadd.f32 %v52, %v131
    %v133 = vpop.f32.mrf.mxu0
    %134 = vdwg.mxu0
    %v135 = vld [vmem:[%s3 + $0x20] sm:$0xff]
    %v136 = vld [vmem:[%s3 + $0x28] sm:$0xff]
    %v137 = vld [vmem:[%s3 + $0x30] sm:$0xff]
    %v138 = vld [vmem:[%s3 + $0x38] sm:$0xff]
    %v139 = vld [vmem:[%s4 + $0x1] sm:$0x1]
    %v140 = vlaneseq
    %v141 = vshrl.u32 %v140, 7
    %v142 = vsub.s32 0, %v141
    %v143 = vrot.slane %v139, %v142
    %v145 = vsel %vm53, %v43, 0
    %147 = vmatprep.subr.mxu0 0.0
    %148 = vmatpush1.msra.mxu0 0.0
    %149 = vmatprep.subr.mxu0 0.0
    %150 = vmatpush1.msra.mxu0 0.0
    %151 = vmatprep.subr.mxu0 0.0
    %152 = vmatpush1.msra.mxu0 0.0
    %153 = vmatprep.subr.mxu0 0.0
    %154 = vmatpush1.msra.mxu0 0.0
    %155 = vmatprep.subr.mxu0 0.0
    %156 = vmatpush1.msra.mxu0 0.0
    %157 = vmatprep.subr.mxu0 0.0
    %158 = vmatpush1.msra.mxu0 0.0
    %159 = vmatprep.subr.mxu0 0.0
    %160 = vmatpush1.msra.mxu0 0.0
    %161 = vmatprep.subr.mxu0 0.0
    %162 = vmatpush1.msra.mxu0 0.0
    %163 = vmatprep.subr.mxu0 0.0
    %164 = vmatpush1.msra.mxu0 0.0
    %165 = vmatprep.subr.mxu0 0.0
    %166 = vmatpush1.msra.mxu0 0.0
    %167 = vmatprep.subr.mxu0 0.0
    %168 = vmatpush1.msra.mxu0 0.0
    %169 = vmatprep.subr.mxu0 0.0
    %170 = vmatpush1.msra.mxu0 0.0
    %171 = vmatprep.subr.mxu0 0.0
    %172 = vmatpush1.msra.mxu0 %v138
    %173 = vmatprep.subr.mxu0 0.0
    %174 = vmatpush1.msra.mxu0 %v137
    %175 = vmatprep.subr.mxu0 0.0
    %176 = vmatpush1.msra.mxu0 %v136
    %177 = vmatprep.subr.mxu0 0.0
    %178 = vmatpush1.msra.mxu0 %v135
    %179 = vmatprep.subr.mxu0 0.0
    %180 = vmatpush2.msra.mxu0 0.0
    %181 = vmatprep.subr.mxu0 0.0
    %182 = vmatpush2.msra.mxu0 0.0
    %183 = vmatprep.subr.mxu0 0.0
    %184 = vmatpush2.msra.mxu0 0.0
    %185 = vmatprep.subr.mxu0 0.0
    %186 = vmatpush2.msra.mxu0 0.0
    %187 = vmatprep.subr.mxu0 0.0
    %188 = vmatpush2.msra.mxu0 0.0
    %189 = vmatprep.subr.mxu0 0.0
    %190 = vmatpush2.msra.mxu0 0.0
    %191 = vmatprep.subr.mxu0 0.0
    %192 = vmatpush2.msra.mxu0 0.0
    %193 = vmatprep.subr.mxu0 0.0
    %194 = vmatpush2.msra.mxu0 0.0
    %195 = vmatprep.subr.mxu0 0.0
    %196 = vmatpush2.msra.mxu0 0.0
    %197 = vmatprep.subr.mxu0 0.0
    %198 = vmatpush2.msra.mxu0 0.0
    %199 = vmatprep.subr.mxu0 0.0
    %200 = vmatpush2.msra.mxu0 0.0
    %201 = vmatprep.subr.mxu0 0.0
    %202 = vmatpush2.msra.mxu0 0.0
    %203 = vmatprep.subr.mxu0 0.0
    %204 = vmatpush2.msra.mxu0 0.0
    %205 = vmatprep.subr.mxu0 0.0
    %206 = vmatpush2.msra.mxu0 0.0
    %207 = vmatprep.subr.mxu0 0.0
    %208 = vmatpush2.msra.mxu0 0.0
    %209 = vmatprep.subr.mxu0 0.0
    %210 = vmatpush2.msra.mxu0 0.0
    %211 = vmatprep.mubr.f32.mxu0 0.0
    %212 = vmatmul.mubr.f32.gmra.mxu0 %v145
    %v213 = vpop.f32.mrf.mxu0
    %v214 = vadd.f32 %v143, %v213
    %v215 = vpop.f32.mrf.mxu0
    %216 = vdwg.mxu0
    %v217 = vmul.f32 %v214, 0.17677669
    %v219 = vsel %vm53, %v217, 0
    %v222 = vsel %vm53, %v127, 0
    %v225 = vsel %vm53, %v132, 0
    %227 = vmatprep.subr.mxu0 0.0
    %228 = vmatpush1.xpose.msra.mxu0 0.0
    %229 = vmatprep.subr.mxu0 0.0
    %230 = vmatpush1.xpose.msra.mxu0 0.0
    %231 = vmatprep.subr.mxu0 0.0
    %232 = vmatpush1.xpose.msra.mxu0 0.0
    %233 = vmatprep.subr.mxu0 0.0
    %234 = vmatpush1.xpose.msra.mxu0 0.0
    %235 = vmatprep.subr.mxu0 0.0
    %236 = vmatpush1.xpose.msra.mxu0 0.0
    %237 = vmatprep.subr.mxu0 0.0
    %238 = vmatpush1.xpose.msra.mxu0 0.0
    %239 = vmatprep.subr.mxu0 0.0
    %240 = vmatpush1.xpose.msra.mxu0 0.0
    %241 = vmatprep.subr.mxu0 0.0
    %242 = vmatpush1.xpose.msra.mxu0 0.0
    %243 = vmatprep.subr.mxu0 0.0
    %244 = vmatpush1.xpose.msra.mxu0 0.0
    %245 = vmatprep.subr.mxu0 0.0
    %246 = vmatpush1.xpose.msra.mxu0 0.0
    %247 = vmatprep.subr.mxu0 0.0
    %248 = vmatpush1.xpose.msra.mxu0 0.0
    %249 = vmatprep.subr.mxu0 0.0
    %250 = vmatpush1.xpose.msra.mxu0 0.0
    %251 = vmatprep.subr.mxu0 0.0
    %252 = vmatpush1.xpose.msra.mxu0 0.0
    %253 = vmatprep.subr.mxu0 0.0
    %254 = vmatpush1.xpose.msra.mxu0 0.0
    %255 = vmatprep.subr.mxu0 0.0
    %256 = vmatpush1.xpose.msra.mxu0 %v225
    %257 = vmatprep.subr.mxu0 0.0
    %258 = vmatpush1.xpose.msra.mxu0 %v222
    %259 = vmatprep.subr.mxu0 0.0
    %260 = vmatpush2.xpose.msra.mxu0 0.0
    %261 = vmatprep.subr.mxu0 0.0
    %262 = vmatpush2.xpose.msra.mxu0 0.0
    %263 = vmatprep.subr.mxu0 0.0
    %264 = vmatpush2.xpose.msra.mxu0 0.0
    %265 = vmatprep.subr.mxu0 0.0
    %266 = vmatpush2.xpose.msra.mxu0 0.0
    %267 = vmatprep.subr.mxu0 0.0
    %268 = vmatpush2.xpose.msra.mxu0 0.0
    %269 = vmatprep.subr.mxu0 0.0
    %270 = vmatpush2.xpose.msra.mxu0 0.0
    %271 = vmatprep.subr.mxu0 0.0
    %272 = vmatpush2.xpose.msra.mxu0 0.0
    %273 = vmatprep.subr.mxu0 0.0
    %274 = vmatpush2.xpose.msra.mxu0 0.0
    %275 = vmatprep.subr.mxu0 0.0
    %276 = vmatpush2.xpose.msra.mxu0 0.0
    %277 = vmatprep.subr.mxu0 0.0
    %278 = vmatpush2.xpose.msra.mxu0 0.0
    %279 = vmatprep.subr.mxu0 0.0
    %280 = vmatpush2.xpose.msra.mxu0 0.0
    %281 = vmatprep.subr.mxu0 0.0
    %282 = vmatpush2.xpose.msra.mxu0 0.0
    %283 = vmatprep.subr.mxu0 0.0
    %284 = vmatpush2.xpose.msra.mxu0 0.0
    %285 = vmatprep.subr.mxu0 0.0
    %286 = vmatpush2.xpose.msra.mxu0 0.0
    %287 = vmatprep.subr.mxu0 0.0
    %288 = vmatpush2.xpose.msra.mxu0 0.0
    %289 = vmatprep.subr.mxu0 0.0
    %290 = vmatpush2.xpose.msra.mxu0 0.0
    %291 = vmatprep.mubr.f32.mxu0 0.0
    %292 = vmatmul.mubr.f32.gmra.mxu0 %v219
    %v293 = vpop.f32.mrf.mxu0
    %v294 = vadd.f32 0.0, %v293
    %v295 = vpop.f32.mrf.mxu0
    %296 = vdwg.mxu0
    %vm297 = vcmask 130048
    %v298 = vsel %vm297, %v294, -inf
    %299 = vmax.xlane.f32.xlu0 %v298
    %v300 = vpop.xlane.xlu0 %299
    %v301 = vsub.f32 %v294, %v300
    %v302 = vmul.f32 %v301, 1.442695
    %v303 = vpow.pop %v302
    %v304 = vsel %vm297, %v303, 0.0
    %305 = vadd.xlane.f32.xlu0 %v304
    %v306 = vpop.xlane.xlu0 %305
    %v307 = vrcp.pop %v306
    %v308 = vmul.f32 %v303, %v307
    %v309 = vmul.f32 %v308, 1.442695
    %v310 = vpow.pop %v309
    %v311 = vld [vmem:[%s2] sm:$0xff]
    %v312 = vld [vmem:[%s2 + $0x8] sm:$0xff]
    %v313 = vld [vmem:[%s2 + $0x10] sm:$0xff]
    %s314 = ssub.f32 0.0, %s36
    %v315 = vstv %s39
    %v316 = vmul.f32 %v315, %v311
    %v317 = vmul.f32 %v315, %v312
    %v318 = vstv %s40
    %v319 = vadd.f32 %v316, %v318
    %v320 = vadd.f32 %v317, %v318
    %v321 = vstv %s314
    %v322 = vmul.f32 %v321, %v319
    %v323 = vmul.f32 %v321, %v320
    %v324 = vmul.f32 %v322, 1.442695
    %v325 = vpow.pop %v324
    %v326 = vmul.f32 %v323, 1.442695
    %v327 = vpow.pop %v326
    %s328 = ssub.f32 0.0, %s37
    %v329 = vmul.f32 %v315, %v313
    %v330 = vadd.f32 %v329, %v318
    %v331 = vstv %s328
    %v332 = vmul.f32 %v331, %v330
    %v333 = vmul.f32 %v332, 1.442695
    %v334 = vpow.pop %v333
    %s335 = ssub.f32 0.0, %s38
    %v336 = vstv %s335
    %v337 = vmul.f32 %v336, %v330
    %v338 = vmul.f32 %v337, 1.442695
    %v339 = vpow.pop %v338
    %v340 = vsel %vm53, %v41, 0.0
    %v341 = vsel %vm53, %v42, 0.0
    %v342 = vadd.f32 %v340, %v341
    %v343 = vrot.slane %v342, 4
    %v344 = vadd.f32 %v342, %v343
    %v345 = vrot.slane %v344, 2
    %v346 = vadd.f32 %v344, %v345
    %v347 = vrot.slane %v346, 1
    %v348 = vadd.f32 %v346, %v347
    %v349 = vrcp.pop 16.0
    %v350 = vmul.f32 %v348, %v349
    %v351 = vsel %vm297, %v310, 0.0
    %352 = vadd.xlane.f32.xlu0 %v351
    %v353 = vpop.xlane.xlu0 %352
    %v354 = vadd.f32 %v353, 1.0
    %v355 = vadd.f32 %v354, %v334
    %v357 = vsel %vm297, %v310, 0
    %359 = vmatprep.subr.mxu0 0.0
    %360 = vmatpush1.msra.mxu0 0.0
    %361 = vmatprep.subr.mxu0 0.0
    %362 = vmatpush1.msra.mxu0 0.0
    %363 = vmatprep.subr.mxu0 0.0
    %364 = vmatpush1.msra.mxu0 0.0
    %365 = vmatprep.subr.mxu0 0.0
    %366 = vmatpush1.msra.mxu0 0.0
    %367 = vmatprep.subr.mxu0 0.0
    %368 = vmatpush1.msra.mxu0 0.0
    %369 = vmatprep.subr.mxu0 0.0
    %370 = vmatpush1.msra.mxu0 0.0
    %371 = vmatprep.subr.mxu0 0.0
    %372 = vmatpush1.msra.mxu0 0.0
    %373 = vmatprep.subr.mxu0 0.0
    %374 = vmatpush1.msra.mxu0 0.0
    %375 = vmatprep.subr.mxu0 0.0
    %376 = vmatpush1.msra.mxu0 0.0
    %377 = vmatprep.subr.mxu0 0.0
    %378 = vmatpush1.msra.mxu0 0.0
    %379 = vmatprep.subr.mxu0 0.0
    %380 = vmatpush1.msra.mxu0 0.0
    %381 = vmatprep.subr.mxu0 0.0
    %382 = vmatpush1.msra.mxu0 0.0
    %383 = vmatprep.subr.mxu0 0.0
    %384 = vmatpush1.msra.mxu0 0.0
    %385 = vmatprep.subr.mxu0 0.0
    %386 = vmatpush1.msra.mxu0 0.0
    %387 = vmatprep.subr.mxu0 0.0
    %388 = vmatpush1.msra.mxu0 %v42
    %389 = vmatprep.subr.mxu0 0.0
    %390 = vmatpush1.msra.mxu0 %v41
    %391 = vmatprep.subr.mxu0 0.0
    %392 = vmatpush2.msra.mxu0 0.0
    %393 = vmatprep.subr.mxu0 0.0
    %394 = vmatpush2.msra.mxu0 0.0
    %395 = vmatprep.subr.mxu0 0.0
    %396 = vmatpush2.msra.mxu0 0.0
    %397 = vmatprep.subr.mxu0 0.0
    %398 = vmatpush2.msra.mxu0 0.0
    %399 = vmatprep.subr.mxu0 0.0
    %400 = vmatpush2.msra.mxu0 0.0
    %401 = vmatprep.subr.mxu0 0.0
    %402 = vmatpush2.msra.mxu0 0.0
    %403 = vmatprep.subr.mxu0 0.0
    %404 = vmatpush2.msra.mxu0 0.0
    %405 = vmatprep.subr.mxu0 0.0
    %406 = vmatpush2.msra.mxu0 0.0
    %407 = vmatprep.subr.mxu0 0.0
    %408 = vmatpush2.msra.mxu0 0.0
    %409 = vmatprep.subr.mxu0 0.0
    %410 = vmatpush2.msra.mxu0 0.0
    %411 = vmatprep.subr.mxu0 0.0
    %412 = vmatpush2.msra.mxu0 0.0
    %413 = vmatprep.subr.mxu0 0.0
    %414 = vmatpush2.msra.mxu0 0.0
    %415 = vmatprep.subr.mxu0 0.0
    %416 = vmatpush2.msra.mxu0 0.0
    %417 = vmatprep.subr.mxu0 0.0
    %418 = vmatpush2.msra.mxu0 0.0
    %419 = vmatprep.subr.mxu0 0.0
    %420 = vmatpush2.msra.mxu0 0.0
    %421 = vmatprep.subr.mxu0 0.0
    %422 = vmatpush2.msra.mxu0 0.0
    %423 = vmatprep.mubr.f32.mxu0 0.0
    %424 = vmatmul.mubr.f32.gmra.mxu0 %v357
    %v425 = vpop.f32.mrf.mxu0
    %v426 = vadd.f32 %v43, %v425
    %v427 = vpop.f32.mrf.mxu0
    %428 = vdwg.mxu0
    %430 = vset.pattern.permute.xlu0 0
    %431 = vperm.xlu0 %430, %v334
    %v432 = vpop.permute.xlu0 %431
    %v434 = vmul.f32 %v432, %v350
    %v435 = vadd.f32 %v426, %v434
    %v436 = vrcp.pop %v355
    %438 = vset.pattern.permute.xlu0 0
    %439 = vperm.xlu0 %438, %v436
    %v440 = vpop.permute.xlu0 %439
    %v442 = vmul.f32 %v435, %v440
    %vm443 = vcmask 7168
    %v444 = vsel %vm443, %v325, 0.0
    %v445 = vsel %vm443, %v327, 0.0
    %v446 = vadd.f32 %v444, %v445
    %v447 = vrot.slane %v446, 4
    %v448 = vadd.f32 %v446, %v447
    %v449 = vrot.slane %v448, 2
    %v450 = vadd.f32 %v448, %v449
    %v451 = vrot.slane %v450, 1
    %v452 = vadd.f32 %v450, %v451
    %v453 = vadd.f32 %v452, 1.0
    %455 = vset.pattern.permute.xlu0 0
    %456 = vperm.xlu0 %455, %v325
    %v457 = vpop.permute.xlu0 %456
    %460 = vset.pattern.permute.xlu0 0
    %461 = vperm.xlu0 %460, %v327
    %v462 = vpop.permute.xlu0 %461
    %v464 = vmul.f32 %v457, %v41
    %v465 = vmul.f32 %v462, %v42
    %v466 = vsel %vm53, %v464, 0.0
    %v467 = vsel %vm53, %v465, 0.0
    %v468 = vadd.f32 %v466, %v467
    %v469 = vrot.slane %v468, 4
    %v470 = vadd.f32 %v468, %v469
    %v471 = vrot.slane %v470, 2
    %v472 = vadd.f32 %v470, %v471
    %v473 = vrot.slane %v472, 1
    %v474 = vadd.f32 %v472, %v473
    %v475 = vadd.f32 %v474, %v350
    %v476 = vrcp.pop %v453
    %478 = vset.pattern.permute.xlu0 0
    %479 = vperm.xlu0 %478, %v476
    %v480 = vpop.permute.xlu0 %479
    %v482 = vmul.f32 %v475, %v480
    %487 = vrot.lane.b32.xlu0 %v135, 96
    %v488 = vpop.permute.xlu0 %487
    %489 = vrot.lane.b32.xlu0 %v136, 96
    %v490 = vpop.permute.xlu0 %489
    %491 = vrot.lane.b32.xlu0 %v137, 96
    %v492 = vpop.permute.xlu0 %491
    %493 = vrot.lane.b32.xlu0 %v138, 96
    %v494 = vpop.permute.xlu0 %493
    %500 = vrot.lane.b32.xlu0 %v143, 96
    %v501 = vpop.permute.xlu0 %500
    %v504 = vsel %vm53, %v442, 0
    %v507 = vsel %vm53, %v482, 0
    %509 = vmatprep.subr.mxu0 0.0
    %510 = vmatpush1.msra.mxu0 0.0
    %511 = vmatprep.subr.mxu0 0.0
    %512 = vmatpush1.msra.mxu0 0.0
    %513 = vmatprep.subr.mxu0 0.0
    %514 = vmatpush1.msra.mxu0 0.0
    %515 = vmatprep.subr.mxu0 0.0
    %516 = vmatpush1.msra.mxu0 0.0
    %517 = vmatprep.subr.mxu0 0.0
    %518 = vmatpush1.msra.mxu0 0.0
    %519 = vmatprep.subr.mxu0 0.0
    %520 = vmatpush1.msra.mxu0 0.0
    %521 = vmatprep.subr.mxu0 0.0
    %522 = vmatpush1.msra.mxu0 0.0
    %523 = vmatprep.subr.mxu0 0.0
    %524 = vmatpush1.msra.mxu0 0.0
    %525 = vmatprep.subr.mxu0 0.0
    %526 = vmatpush1.msra.mxu0 0.0
    %527 = vmatprep.subr.mxu0 0.0
    %528 = vmatpush1.msra.mxu0 0.0
    %529 = vmatprep.subr.mxu0 0.0
    %530 = vmatpush1.msra.mxu0 0.0
    %531 = vmatprep.subr.mxu0 0.0
    %532 = vmatpush1.msra.mxu0 0.0
    %533 = vmatprep.subr.mxu0 0.0
    %534 = vmatpush1.msra.mxu0 %v494
    %535 = vmatprep.subr.mxu0 0.0
    %536 = vmatpush1.msra.mxu0 %v492
    %537 = vmatprep.subr.mxu0 0.0
    %538 = vmatpush1.msra.mxu0 %v490
    %539 = vmatprep.subr.mxu0 0.0
    %540 = vmatpush1.msra.mxu0 %v488
    %541 = vmatprep.subr.mxu0 0.0
    %542 = vmatpush2.msra.mxu0 0.0
    %543 = vmatprep.subr.mxu0 0.0
    %544 = vmatpush2.msra.mxu0 0.0
    %545 = vmatprep.subr.mxu0 0.0
    %546 = vmatpush2.msra.mxu0 0.0
    %547 = vmatprep.subr.mxu0 0.0
    %548 = vmatpush2.msra.mxu0 0.0
    %549 = vmatprep.subr.mxu0 0.0
    %550 = vmatpush2.msra.mxu0 0.0
    %551 = vmatprep.subr.mxu0 0.0
    %552 = vmatpush2.msra.mxu0 0.0
    %553 = vmatprep.subr.mxu0 0.0
    %554 = vmatpush2.msra.mxu0 0.0
    %555 = vmatprep.subr.mxu0 0.0
    %556 = vmatpush2.msra.mxu0 0.0
    %557 = vmatprep.subr.mxu0 0.0
    %558 = vmatpush2.msra.mxu0 0.0
    %559 = vmatprep.subr.mxu0 0.0
    %560 = vmatpush2.msra.mxu0 0.0
    %561 = vmatprep.subr.mxu0 0.0
    %562 = vmatpush2.msra.mxu0 0.0
    %563 = vmatprep.subr.mxu0 0.0
    %564 = vmatpush2.msra.mxu0 0.0
    %565 = vmatprep.subr.mxu0 0.0
    %566 = vmatpush2.msra.mxu0 0.0
    %567 = vmatprep.subr.mxu0 0.0
    %568 = vmatpush2.msra.mxu0 0.0
    %569 = vmatprep.subr.mxu0 0.0
    %570 = vmatpush2.msra.mxu0 0.0
    %571 = vmatprep.subr.mxu0 0.0
    %572 = vmatpush2.msra.mxu0 0.0
    %573 = vmatprep.mubr.f32.mxu0 0.0
    %574 = vmatmul.mubr.f32.gmra.mxu0 %v504
    %v575 = vpop.f32.mrf.mxu0
    %v576 = vadd.f32 %v501, %v575
    %v577 = vpop.f32.mrf.mxu0
    %578 = vmatprep.mubr.f32.mxu0 0.0
    %579 = vmatmul.mubr.f32.gmra.mxu0 %v507
    %v580 = vpop.f32.mrf.mxu0
    %v581 = vadd.f32 %v501, %v580
    %v582 = vpop.f32.mrf.mxu0
    %583 = vdwg.mxu0
    %v584 = vadd.f32 %v339, 1.0
    %586 = vset.pattern.permute.xlu0 0
    %587 = vperm.xlu0 %586, %v339
    %v588 = vpop.permute.xlu0 %587
    %v590 = vlaneseq
    %v591 = vshrl.u32 %v590, 7
    %v592 = vsub.s32 0, %v591
    %v593 = vrot.slane %v581, %v592
    %v594 = vmul.f32 %v588, %v593
    %v595 = vadd.f32 %v576, %v594
    %v596 = vrcp.pop %v584
    %598 = vset.pattern.permute.xlu0 0
    %599 = vperm.xlu0 %598, %v596
    %v600 = vpop.permute.xlu0 %599
    %v602 = vmul.f32 %v595, %v600
    %v603 = vld [vmem:[%s3 + $0x40] sm:$0xff]
    %v604 = vld [vmem:[%s3 + $0x48] sm:$0xff]
    %v605 = vld [vmem:[%s3 + $0x50] sm:$0xff]
    %v606 = vld [vmem:[%s3 + $0x58] sm:$0xff]
    %v607 = vld [vmem:[%s4 + $0x2] sm:$0x1]
    %v608 = vlaneseq
    %v609 = vshrl.u32 %v608, 7
    %v610 = vsub.s32 0, %v609
    %v611 = vrot.slane %v607, %v610
    %v613 = vsel %vm53, %v602, 0
    %615 = vmatprep.subr.mxu0 0.0
    %616 = vmatpush1.msra.mxu0 0.0
    %617 = vmatprep.subr.mxu0 0.0
    %618 = vmatpush1.msra.mxu0 0.0
    %619 = vmatprep.subr.mxu0 0.0
    %620 = vmatpush1.msra.mxu0 0.0
    %621 = vmatprep.subr.mxu0 0.0
    %622 = vmatpush1.msra.mxu0 0.0
    %623 = vmatprep.subr.mxu0 0.0
    %624 = vmatpush1.msra.mxu0 0.0
    %625 = vmatprep.subr.mxu0 0.0
    %626 = vmatpush1.msra.mxu0 0.0
    %627 = vmatprep.subr.mxu0 0.0
    %628 = vmatpush1.msra.mxu0 0.0
    %629 = vmatprep.subr.mxu0 0.0
    %630 = vmatpush1.msra.mxu0 0.0
    %631 = vmatprep.subr.mxu0 0.0
    %632 = vmatpush1.msra.mxu0 0.0
    %633 = vmatprep.subr.mxu0 0.0
    %634 = vmatpush1.msra.mxu0 0.0
    %635 = vmatprep.subr.mxu0 0.0
    %636 = vmatpush1.msra.mxu0 0.0
    %637 = vmatprep.subr.mxu0 0.0
    %638 = vmatpush1.msra.mxu0 0.0
    %639 = vmatprep.subr.mxu0 0.0
    %640 = vmatpush1.msra.mxu0 %v606
    %641 = vmatprep.subr.mxu0 0.0
    %642 = vmatpush1.msra.mxu0 %v605
    %643 = vmatprep.subr.mxu0 0.0
    %644 = vmatpush1.msra.mxu0 %v604
    %645 = vmatprep.subr.mxu0 0.0
    %646 = vmatpush1.msra.mxu0 %v603
    %647 = vmatprep.subr.mxu0 0.0
    %648 = vmatpush2.msra.mxu0 0.0
    %649 = vmatprep.subr.mxu0 0.0
    %650 = vmatpush2.msra.mxu0 0.0
    %651 = vmatprep.subr.mxu0 0.0
    %652 = vmatpush2.msra.mxu0 0.0
    %653 = vmatprep.subr.mxu0 0.0
    %654 = vmatpush2.msra.mxu0 0.0
    %655 = vmatprep.subr.mxu0 0.0
    %656 = vmatpush2.msra.mxu0 0.0
    %657 = vmatprep.subr.mxu0 0.0
    %658 = vmatpush2.msra.mxu0 0.0
    %659 = vmatprep.subr.mxu0 0.0
    %660 = vmatpush2.msra.mxu0 0.0
    %661 = vmatprep.subr.mxu0 0.0
    %662 = vmatpush2.msra.mxu0 0.0
    %663 = vmatprep.subr.mxu0 0.0
    %664 = vmatpush2.msra.mxu0 0.0
    %665 = vmatprep.subr.mxu0 0.0
    %666 = vmatpush2.msra.mxu0 0.0
    %667 = vmatprep.subr.mxu0 0.0
    %668 = vmatpush2.msra.mxu0 0.0
    %669 = vmatprep.subr.mxu0 0.0
    %670 = vmatpush2.msra.mxu0 0.0
    %671 = vmatprep.subr.mxu0 0.0
    %672 = vmatpush2.msra.mxu0 0.0
    %673 = vmatprep.subr.mxu0 0.0
    %674 = vmatpush2.msra.mxu0 0.0
    %675 = vmatprep.subr.mxu0 0.0
    %676 = vmatpush2.msra.mxu0 0.0
    %677 = vmatprep.subr.mxu0 0.0
    %678 = vmatpush2.msra.mxu0 0.0
    %679 = vmatprep.mubr.f32.mxu0 0.0
    %680 = vmatmul.mubr.f32.gmra.mxu0 %v613
    %v681 = vpop.f32.mrf.mxu0
    %v682 = vadd.f32 %v611, %v681
    %v683 = vpop.f32.mrf.mxu0
    %684 = vdwg.mxu0
    %v685 = vld [vmem:[%s3 + $0x60] sm:$0xff]
    %v686 = vld [vmem:[%s3 + $0x68] sm:$0xff]
    %v687 = vld [vmem:[%s3 + $0x70] sm:$0xff]
    %v688 = vld [vmem:[%s3 + $0x78] sm:$0xff]
    %v690 = vsel %vm53, %v576, 0
    %692 = vmatprep.subr.mxu0 0.0
    %693 = vmatpush1.msra.mxu0 0.0
    %694 = vmatprep.subr.mxu0 0.0
    %695 = vmatpush1.msra.mxu0 0.0
    %696 = vmatprep.subr.mxu0 0.0
    %697 = vmatpush1.msra.mxu0 0.0
    %698 = vmatprep.subr.mxu0 0.0
    %699 = vmatpush1.msra.mxu0 0.0
    %700 = vmatprep.subr.mxu0 0.0
    %701 = vmatpush1.msra.mxu0 0.0
    %702 = vmatprep.subr.mxu0 0.0
    %703 = vmatpush1.msra.mxu0 0.0
    %704 = vmatprep.subr.mxu0 0.0
    %705 = vmatpush1.msra.mxu0 0.0
    %706 = vmatprep.subr.mxu0 0.0
    %707 = vmatpush1.msra.mxu0 0.0
    %708 = vmatprep.subr.mxu0 0.0
    %709 = vmatpush1.msra.mxu0 0.0
    %710 = vmatprep.subr.mxu0 0.0
    %711 = vmatpush1.msra.mxu0 0.0
    %712 = vmatprep.subr.mxu0 0.0
    %713 = vmatpush1.msra.mxu0 0.0
    %714 = vmatprep.subr.mxu0 0.0
    %715 = vmatpush1.msra.mxu0 0.0
    %716 = vmatprep.subr.mxu0 0.0
    %717 = vmatpush1.msra.mxu0 %v688
    %718 = vmatprep.subr.mxu0 0.0
    %719 = vmatpush1.msra.mxu0 %v687
    %720 = vmatprep.subr.mxu0 0.0
    %721 = vmatpush1.msra.mxu0 %v686
    %722 = vmatprep.subr.mxu0 0.0
    %723 = vmatpush1.msra.mxu0 %v685
    %724 = vmatprep.subr.mxu0 0.0
    %725 = vmatpush2.msra.mxu0 0.0
    %726 = vmatprep.subr.mxu0 0.0
    %727 = vmatpush2.msra.mxu0 0.0
    %728 = vmatprep.subr.mxu0 0.0
    %729 = vmatpush2.msra.mxu0 0.0
    %730 = vmatprep.subr.mxu0 0.0
    %731 = vmatpush2.msra.mxu0 0.0
    %732 = vmatprep.subr.mxu0 0.0
    %733 = vmatpush2.msra.mxu0 0.0
    %734 = vmatprep.subr.mxu0 0.0
    %735 = vmatpush2.msra.mxu0 0.0
    %736 = vmatprep.subr.mxu0 0.0
    %737 = vmatpush2.msra.mxu0 0.0
    %738 = vmatprep.subr.mxu0 0.0
    %739 = vmatpush2.msra.mxu0 0.0
    %740 = vmatprep.subr.mxu0 0.0
    %741 = vmatpush2.msra.mxu0 0.0
    %742 = vmatprep.subr.mxu0 0.0
    %743 = vmatpush2.msra.mxu0 0.0
    %744 = vmatprep.subr.mxu0 0.0
    %745 = vmatpush2.msra.mxu0 0.0
    %746 = vmatprep.subr.mxu0 0.0
    %747 = vmatpush2.msra.mxu0 0.0
    %748 = vmatprep.subr.mxu0 0.0
    %749 = vmatpush2.msra.mxu0 0.0
    %750 = vmatprep.subr.mxu0 0.0
    %751 = vmatpush2.msra.mxu0 0.0
    %752 = vmatprep.subr.mxu0 0.0
    %753 = vmatpush2.msra.mxu0 0.0
    %754 = vmatprep.subr.mxu0 0.0
    %755 = vmatpush2.msra.mxu0 0.0
    %756 = vmatprep.mubr.f32.mxu0 0.0
    %757 = vmatmul.mubr.f32.gmra.mxu0 %v690
    %v758 = vpop.f32.mrf.mxu0
    %v759 = vadd.f32 0.0, %v758
    %v760 = vpop.f32.mrf.mxu0
    %761 = vdwg.mxu0
    %766 = vrot.lane.b32.xlu0 %v603, 96
    %v767 = vpop.permute.xlu0 %766
    %768 = vrot.lane.b32.xlu0 %v604, 96
    %v769 = vpop.permute.xlu0 %768
    %770 = vrot.lane.b32.xlu0 %v605, 96
    %v771 = vpop.permute.xlu0 %770
    %772 = vrot.lane.b32.xlu0 %v606, 96
    %v773 = vpop.permute.xlu0 %772
    %778 = vmatprep.subr.mxu0 0.0
    %779 = vmatpush1.msra.mxu0 0.0
    %780 = vmatprep.subr.mxu0 0.0
    %781 = vmatpush1.msra.mxu0 0.0
    %782 = vmatprep.subr.mxu0 0.0
    %783 = vmatpush1.msra.mxu0 0.0
    %784 = vmatprep.subr.mxu0 0.0
    %785 = vmatpush1.msra.mxu0 0.0
    %786 = vmatprep.subr.mxu0 0.0
    %787 = vmatpush1.msra.mxu0 0.0
    %788 = vmatprep.subr.mxu0 0.0
    %789 = vmatpush1.msra.mxu0 0.0
    %790 = vmatprep.subr.mxu0 0.0
    %791 = vmatpush1.msra.mxu0 0.0
    %792 = vmatprep.subr.mxu0 0.0
    %793 = vmatpush1.msra.mxu0 0.0
    %794 = vmatprep.subr.mxu0 0.0
    %795 = vmatpush1.msra.mxu0 0.0
    %796 = vmatprep.subr.mxu0 0.0
    %797 = vmatpush1.msra.mxu0 0.0
    %798 = vmatprep.subr.mxu0 0.0
    %799 = vmatpush1.msra.mxu0 0.0
    %800 = vmatprep.subr.mxu0 0.0
    %801 = vmatpush1.msra.mxu0 0.0
    %802 = vmatprep.subr.mxu0 0.0
    %803 = vmatpush1.msra.mxu0 %v773
    %804 = vmatprep.subr.mxu0 0.0
    %805 = vmatpush1.msra.mxu0 %v771
    %806 = vmatprep.subr.mxu0 0.0
    %807 = vmatpush1.msra.mxu0 %v769
    %808 = vmatprep.subr.mxu0 0.0
    %809 = vmatpush1.msra.mxu0 %v767
    %810 = vmatprep.subr.mxu0 0.0
    %811 = vmatpush2.msra.mxu0 0.0
    %812 = vmatprep.subr.mxu0 0.0
    %813 = vmatpush2.msra.mxu0 0.0
    %814 = vmatprep.subr.mxu0 0.0
    %815 = vmatpush2.msra.mxu0 0.0
    %816 = vmatprep.subr.mxu0 0.0
    %817 = vmatpush2.msra.mxu0 0.0
    %818 = vmatprep.subr.mxu0 0.0
    %819 = vmatpush2.msra.mxu0 0.0
    %820 = vmatprep.subr.mxu0 0.0
    %821 = vmatpush2.msra.mxu0 0.0
    %822 = vmatprep.subr.mxu0 0.0
    %823 = vmatpush2.msra.mxu0 0.0
    %824 = vmatprep.subr.mxu0 0.0
    %825 = vmatpush2.msra.mxu0 0.0
    %826 = vmatprep.subr.mxu0 0.0
    %827 = vmatpush2.msra.mxu0 0.0
    %828 = vmatprep.subr.mxu0 0.0
    %829 = vmatpush2.msra.mxu0 0.0
    %830 = vmatprep.subr.mxu0 0.0
    %831 = vmatpush2.msra.mxu0 0.0
    %832 = vmatprep.subr.mxu0 0.0
    %833 = vmatpush2.msra.mxu0 0.0
    %834 = vmatprep.subr.mxu0 0.0
    %835 = vmatpush2.msra.mxu0 0.0
    %836 = vmatprep.subr.mxu0 0.0
    %837 = vmatpush2.msra.mxu0 0.0
    %838 = vmatprep.subr.mxu0 0.0
    %839 = vmatpush2.msra.mxu0 0.0
    %840 = vmatprep.subr.mxu0 0.0
    %841 = vmatpush2.msra.mxu0 0.0
    %842 = vmatprep.mubr.f32.mxu0 0.0
    %843 = vmatmul.mubr.f32.gmra.mxu0 %v145
    %v844 = vpop.f32.mrf.mxu0
    %v845 = vadd.f32 %v759, %v844
    %v846 = vpop.f32.mrf.mxu0
    %847 = vdwg.mxu0
    %852 = vrot.lane.b32.xlu0 %v685, 96
    %v853 = vpop.permute.xlu0 %852
    %854 = vrot.lane.b32.xlu0 %v686, 96
    %v855 = vpop.permute.xlu0 %854
    %856 = vrot.lane.b32.xlu0 %v687, 96
    %v857 = vpop.permute.xlu0 %856
    %858 = vrot.lane.b32.xlu0 %v688, 96
    %v859 = vpop.permute.xlu0 %858
    %v865 = vsel %vm53, %v682, 0
    %867 = vmatprep.subr.mxu0 0.0
    %868 = vmatpush1.msra.mxu0 0.0
    %869 = vmatprep.subr.mxu0 0.0
    %870 = vmatpush1.msra.mxu0 0.0
    %871 = vmatprep.subr.mxu0 0.0
    %872 = vmatpush1.msra.mxu0 0.0
    %873 = vmatprep.subr.mxu0 0.0
    %874 = vmatpush1.msra.mxu0 0.0
    %875 = vmatprep.subr.mxu0 0.0
    %876 = vmatpush1.msra.mxu0 0.0
    %877 = vmatprep.subr.mxu0 0.0
    %878 = vmatpush1.msra.mxu0 0.0
    %879 = vmatprep.subr.mxu0 0.0
    %880 = vmatpush1.msra.mxu0 0.0
    %881 = vmatprep.subr.mxu0 0.0
    %882 = vmatpush1.msra.mxu0 0.0
    %883 = vmatprep.subr.mxu0 0.0
    %884 = vmatpush1.msra.mxu0 0.0
    %885 = vmatprep.subr.mxu0 0.0
    %886 = vmatpush1.msra.mxu0 0.0
    %887 = vmatprep.subr.mxu0 0.0
    %888 = vmatpush1.msra.mxu0 0.0
    %889 = vmatprep.subr.mxu0 0.0
    %890 = vmatpush1.msra.mxu0 0.0
    %891 = vmatprep.subr.mxu0 0.0
    %892 = vmatpush1.msra.mxu0 %v859
    %893 = vmatprep.subr.mxu0 0.0
    %894 = vmatpush1.msra.mxu0 %v857
    %895 = vmatprep.subr.mxu0 0.0
    %896 = vmatpush1.msra.mxu0 %v855
    %897 = vmatprep.subr.mxu0 0.0
    %898 = vmatpush1.msra.mxu0 %v853
    %899 = vmatprep.subr.mxu0 0.0
    %900 = vmatpush2.msra.mxu0 0.0
    %901 = vmatprep.subr.mxu0 0.0
    %902 = vmatpush2.msra.mxu0 0.0
    %903 = vmatprep.subr.mxu0 0.0
    %904 = vmatpush2.msra.mxu0 0.0
    %905 = vmatprep.subr.mxu0 0.0
    %906 = vmatpush2.msra.mxu0 0.0
    %907 = vmatprep.subr.mxu0 0.0
    %908 = vmatpush2.msra.mxu0 0.0
    %909 = vmatprep.subr.mxu0 0.0
    %910 = vmatpush2.msra.mxu0 0.0
    %911 = vmatprep.subr.mxu0 0.0
    %912 = vmatpush2.msra.mxu0 0.0
    %913 = vmatprep.subr.mxu0 0.0
    %914 = vmatpush2.msra.mxu0 0.0
    %915 = vmatprep.subr.mxu0 0.0
    %916 = vmatpush2.msra.mxu0 0.0
    %917 = vmatprep.subr.mxu0 0.0
    %918 = vmatpush2.msra.mxu0 0.0
    %919 = vmatprep.subr.mxu0 0.0
    %920 = vmatpush2.msra.mxu0 0.0
    %921 = vmatprep.subr.mxu0 0.0
    %922 = vmatpush2.msra.mxu0 0.0
    %923 = vmatprep.subr.mxu0 0.0
    %924 = vmatpush2.msra.mxu0 0.0
    %925 = vmatprep.subr.mxu0 0.0
    %926 = vmatpush2.msra.mxu0 0.0
    %927 = vmatprep.subr.mxu0 0.0
    %928 = vmatpush2.msra.mxu0 0.0
    %929 = vmatprep.subr.mxu0 0.0
    %930 = vmatpush2.msra.mxu0 0.0
    %931 = vmatprep.mubr.f32.mxu0 0.0
    %932 = vmatmul.mubr.f32.gmra.mxu0 %v865
    %v933 = vpop.f32.mrf.mxu0
    %v934 = vadd.f32 0.0, %v933
    %v935 = vpop.f32.mrf.mxu0
    %936 = vdwg.mxu0
    %v937 = vadd.f32 %v845, %v934
    %939 = vrot.lane.b32.xlu0 %v611, 96
    %v940 = vpop.permute.xlu0 %939
    %v942 = vadd.f32 %v937, %v940
    %v943 = vmul.f32 %v942, 0.17677669
    %944 = vrot.lane.b32.xlu0 %v127, 96
    %v945 = vpop.permute.xlu0 %944
    %946 = vrot.lane.b32.xlu0 %v132, 96
    %v947 = vpop.permute.xlu0 %946
    %v949 = vsel %vm53, %v943, 0
    %v951 = vsel %vm53, %v945, 0
    %v953 = vsel %vm53, %v947, 0
    %955 = vmatprep.subr.mxu0 0.0
    %956 = vmatpush1.xpose.msra.mxu0 0.0
    %957 = vmatprep.subr.mxu0 0.0
    %958 = vmatpush1.xpose.msra.mxu0 0.0
    %959 = vmatprep.subr.mxu0 0.0
    %960 = vmatpush1.xpose.msra.mxu0 0.0
    %961 = vmatprep.subr.mxu0 0.0
    %962 = vmatpush1.xpose.msra.mxu0 0.0
    %963 = vmatprep.subr.mxu0 0.0
    %964 = vmatpush1.xpose.msra.mxu0 0.0
    %965 = vmatprep.subr.mxu0 0.0
    %966 = vmatpush1.xpose.msra.mxu0 0.0
    %967 = vmatprep.subr.mxu0 0.0
    %968 = vmatpush1.xpose.msra.mxu0 0.0
    %969 = vmatprep.subr.mxu0 0.0
    %970 = vmatpush1.xpose.msra.mxu0 0.0
    %971 = vmatprep.subr.mxu0 0.0
    %972 = vmatpush1.xpose.msra.mxu0 0.0
    %973 = vmatprep.subr.mxu0 0.0
    %974 = vmatpush1.xpose.msra.mxu0 0.0
    %975 = vmatprep.subr.mxu0 0.0
    %976 = vmatpush1.xpose.msra.mxu0 0.0
    %977 = vmatprep.subr.mxu0 0.0
    %978 = vmatpush1.xpose.msra.mxu0 0.0
    %979 = vmatprep.subr.mxu0 0.0
    %980 = vmatpush1.xpose.msra.mxu0 0.0
    %981 = vmatprep.subr.mxu0 0.0
    %982 = vmatpush1.xpose.msra.mxu0 0.0
    %983 = vmatprep.subr.mxu0 0.0
    %984 = vmatpush1.xpose.msra.mxu0 %v953
    %985 = vmatprep.subr.mxu0 0.0
    %986 = vmatpush1.xpose.msra.mxu0 %v951
    %987 = vmatprep.subr.mxu0 0.0
    %988 = vmatpush2.xpose.msra.mxu0 0.0
    %989 = vmatprep.subr.mxu0 0.0
    %990 = vmatpush2.xpose.msra.mxu0 0.0
    %991 = vmatprep.subr.mxu0 0.0
    %992 = vmatpush2.xpose.msra.mxu0 0.0
    %993 = vmatprep.subr.mxu0 0.0
    %994 = vmatpush2.xpose.msra.mxu0 0.0
    %995 = vmatprep.subr.mxu0 0.0
    %996 = vmatpush2.xpose.msra.mxu0 0.0
    %997 = vmatprep.subr.mxu0 0.0
    %998 = vmatpush2.xpose.msra.mxu0 0.0
    %999 = vmatprep.subr.mxu0 0.0
    %1000 = vmatpush2.xpose.msra.mxu0 0.0
    %1001 = vmatprep.subr.mxu0 0.0
    %1002 = vmatpush2.xpose.msra.mxu0 0.0
    %1003 = vmatprep.subr.mxu0 0.0
    %1004 = vmatpush2.xpose.msra.mxu0 0.0
    %1005 = vmatprep.subr.mxu0 0.0
    %1006 = vmatpush2.xpose.msra.mxu0 0.0
    %1007 = vmatprep.subr.mxu0 0.0
    %1008 = vmatpush2.xpose.msra.mxu0 0.0
    %1009 = vmatprep.subr.mxu0 0.0
    %1010 = vmatpush2.xpose.msra.mxu0 0.0
    %1011 = vmatprep.subr.mxu0 0.0
    %1012 = vmatpush2.xpose.msra.mxu0 0.0
    %1013 = vmatprep.subr.mxu0 0.0
    %1014 = vmatpush2.xpose.msra.mxu0 0.0
    %1015 = vmatprep.subr.mxu0 0.0
    %1016 = vmatpush2.xpose.msra.mxu0 0.0
    %1017 = vmatprep.subr.mxu0 0.0
    %1018 = vmatpush2.xpose.msra.mxu0 0.0
    %1019 = vmatprep.mubr.f32.mxu0 0.0
    %1020 = vmatmul.mubr.f32.gmra.mxu0 %v949
    %v1021 = vpop.f32.mrf.mxu0
    %v1022 = vadd.f32 0.0, %v1021
    %v1023 = vpop.f32.mrf.mxu0
    %1024 = vdwg.mxu0
    %v1025 = vsel %vm297, %v1022, -inf
    %1026 = vmax.xlane.f32.xlu0 %v1025
    %v1027 = vpop.xlane.xlu0 %1026
    %v1028 = vsub.f32 %v1022, %v1027
    %v1029 = vmul.f32 %v1028, 1.442695
    %v1030 = vpow.pop %v1029
    %v1031 = vsel %vm297, %v1030, 0.0
    %1032 = vadd.xlane.f32.xlu0 %v1031
    %v1033 = vpop.xlane.xlu0 %1032
    %v1034 = vrcp.pop %v1033
    %v1035 = vmul.f32 %v1030, %v1034
    %v1036 = vld [vmem:[%s4 + $0x3] sm:$0x1]
    %1037 = vset.pattern.permute.xlu0 30
    %1038 = vperm.xlu0 %1037, %v41
    %v1039 = vpop.permute.xlu0 %1038
    %1041 = vset.pattern.permute.xlu0 30
    %1042 = vperm.xlu0 %1041, %v42
    %v1043 = vpop.permute.xlu0 %1042
    %v1045 = vlaneseq
    %v1046 = vshrl.u32 %v1045, 7
    %v1047 = vsub.s32 0, %v1046
    %v1048 = vrot.slane %v1036, %v1047
    %v1049 = vmul.f32 %v1039, %v1048
    %v1050 = vmul.f32 %v1043, %v1048
    %v1051 = vld [vmem:[%s4 + $0x4] sm:$0x1]
    %1052 = vset.pattern.permute.xlu0 31
    %1053 = vperm.xlu0 %1052, %v41
    %v1054 = vpop.permute.xlu0 %1053
    %1056 = vset.pattern.permute.xlu0 31
    %1057 = vperm.xlu0 %1056, %v42
    %v1058 = vpop.permute.xlu0 %1057
    %v1060 = vlaneseq
    %v1061 = vshrl.u32 %v1060, 7
    %v1062 = vsub.s32 0, %v1061
    %v1063 = vrot.slane %v1051, %v1062
    %v1064 = vmul.f32 %v1054, %v1063
    %v1065 = vmul.f32 %v1058, %v1063
    %v1066 = vadd.f32 %v1049, %v1064
    %v1067 = vadd.f32 %v1050, %v1065
    %v1068 = vld [vmem:[%s4 + $0x5] sm:$0x1]
    %v1069 = vlaneseq
    %v1070 = vshrl.u32 %v1069, 7
    %v1071 = vsub.s32 0, %v1070
    %v1072 = vrot.slane %v1068, %v1071
    %v1073 = vadd.f32 %v1066, %v1072
    %v1074 = vadd.f32 %v1067, %v1072
    %v1076 = vsel %vm297, %v1035, 0
    %1078 = vmatprep.subr.mxu0 0.0
    %1079 = vmatpush1.msra.mxu0 0.0
    %1080 = vmatprep.subr.mxu0 0.0
    %1081 = vmatpush1.msra.mxu0 0.0
    %1082 = vmatprep.subr.mxu0 0.0
    %1083 = vmatpush1.msra.mxu0 0.0
    %1084 = vmatprep.subr.mxu0 0.0
    %1085 = vmatpush1.msra.mxu0 0.0
    %1086 = vmatprep.subr.mxu0 0.0
    %1087 = vmatpush1.msra.mxu0 0.0
    %1088 = vmatprep.subr.mxu0 0.0
    %1089 = vmatpush1.msra.mxu0 0.0
    %1090 = vmatprep.subr.mxu0 0.0
    %1091 = vmatpush1.msra.mxu0 0.0
    %1092 = vmatprep.subr.mxu0 0.0
    %1093 = vmatpush1.msra.mxu0 0.0
    %1094 = vmatprep.subr.mxu0 0.0
    %1095 = vmatpush1.msra.mxu0 0.0
    %1096 = vmatprep.subr.mxu0 0.0
    %1097 = vmatpush1.msra.mxu0 0.0
    %1098 = vmatprep.subr.mxu0 0.0
    %1099 = vmatpush1.msra.mxu0 0.0
    %1100 = vmatprep.subr.mxu0 0.0
    %1101 = vmatpush1.msra.mxu0 0.0
    %1102 = vmatprep.subr.mxu0 0.0
    %1103 = vmatpush1.msra.mxu0 0.0
    %1104 = vmatprep.subr.mxu0 0.0
    %1105 = vmatpush1.msra.mxu0 0.0
    %1106 = vmatprep.subr.mxu0 0.0
    %1107 = vmatpush1.msra.mxu0 %v1074
    %1108 = vmatprep.subr.mxu0 0.0
    %1109 = vmatpush1.msra.mxu0 %v1073
    %1110 = vmatprep.subr.mxu0 0.0
    %1111 = vmatpush2.msra.mxu0 0.0
    %1112 = vmatprep.subr.mxu0 0.0
    %1113 = vmatpush2.msra.mxu0 0.0
    %1114 = vmatprep.subr.mxu0 0.0
    %1115 = vmatpush2.msra.mxu0 0.0
    %1116 = vmatprep.subr.mxu0 0.0
    %1117 = vmatpush2.msra.mxu0 0.0
    %1118 = vmatprep.subr.mxu0 0.0
    %1119 = vmatpush2.msra.mxu0 0.0
    %1120 = vmatprep.subr.mxu0 0.0
    %1121 = vmatpush2.msra.mxu0 0.0
    %1122 = vmatprep.subr.mxu0 0.0
    %1123 = vmatpush2.msra.mxu0 0.0
    %1124 = vmatprep.subr.mxu0 0.0
    %1125 = vmatpush2.msra.mxu0 0.0
    %1126 = vmatprep.subr.mxu0 0.0
    %1127 = vmatpush2.msra.mxu0 0.0
    %1128 = vmatprep.subr.mxu0 0.0
    %1129 = vmatpush2.msra.mxu0 0.0
    %1130 = vmatprep.subr.mxu0 0.0
    %1131 = vmatpush2.msra.mxu0 0.0
    %1132 = vmatprep.subr.mxu0 0.0
    %1133 = vmatpush2.msra.mxu0 0.0
    %1134 = vmatprep.subr.mxu0 0.0
    %1135 = vmatpush2.msra.mxu0 0.0
    %1136 = vmatprep.subr.mxu0 0.0
    %1137 = vmatpush2.msra.mxu0 0.0
    %1138 = vmatprep.subr.mxu0 0.0
    %1139 = vmatpush2.msra.mxu0 0.0
    %1140 = vmatprep.subr.mxu0 0.0
    %1141 = vmatpush2.msra.mxu0 0.0
    %1142 = vmatprep.mubr.f32.mxu0 0.0
    %1143 = vmatmul.mubr.f32.gmra.mxu0 %v1076
    %v1144 = vpop.f32.mrf.mxu0
    %v1145 = vadd.f32 0.0, %v1144
    %v1146 = vpop.f32.mrf.mxu0
    %1147 = vdwg.mxu0
    %1148 = vrot.lane.b32.xlu0 %v576, 30
    %v1149 = vpop.permute.xlu0 %1148
    %1151 = vrot.lane.b32.xlu0 %v682, 62
    %v1152 = vpop.permute.xlu0 %1151
    %1155 = vrot.lane.b32.xlu0 %v1145, 94
    %v1156 = vpop.permute.xlu0 %1155
    %vm1158 = vcmask 244736
    %v1159 = vsel %vm1158, %v43, %v1149
    %vm1160 = vcmask 506880
    %v1161 = vsel %vm1160, %v1159, %v1152
    %vm1162 = vcmask 769024
    %v1163 = vsel %vm1162, %v1161, %v1156
    %vm1164 = vcmask 785408
    %v1165 = vsel %vm1164, %v1163, 0.0
    %1166 = vst [vmem:[%s6] sm:$0xff] %v1165
    // Predicated region
    $region30: #{ripgeo_forward.1} parent=1 // pred_check
      _
    $region31: #{ripgeo_forward.1} parent=1 // pred_check_branch
      %1168 = sbr.rel (0) target = $region33
    $region32: #{ripgeo_forward.1} parent=1 // pred_region
      _
    $region33: #{ripgeo_forward.1} parent=1 // pred_fallthru
      _
    // Predicated region
    $region34: #{ripgeo_forward.1} parent=1 // pred_check
      _
    $region35: #{ripgeo_forward.1} parent=1 // pred_check_branch
      %1170 = sbr.rel (0) target = $region37
    $region36: #{ripgeo_forward.1} parent=1 // pred_region
      _
    $region37: #{ripgeo_forward.1} parent=1 // pred_fallthru
      _
    %1171 = vsyncpa [#allocation3], 1

</llo_original>
